<compile_context>
chip_gen: v7x
topology: tpu7x:2x2x1
jax: 0.10.0
libtpu: 0.0.40
codegen_flags: <defaults>
</compile_context>

<pallas_src>
import functools

import jax
import jax.numpy as jnp
from jax.experimental import pallas as pl
from jax.experimental.pallas import tpu as pltpu


def _leaky_relu(x, slope=0.2):
    return jnp.where(x > 0, x, slope * x)


def _round_up(n, m):
    return ((n + m - 1) // m) * m


def discriminator_mlp_kernel(
    img_ref, lbl_ref, cls_ref,
    w1_ref,
    w2_ref, b2_ref,
    w3_ref, b3_ref,
    w4_ref, b4_ref,
    w5t_ref, b5_ref,
    out_ref,
):
    # Layer 1 image path: cast to bf16 in-kernel (no wrapper astype copy),
    # lane-aligned K = C*H*W.
    x = img_ref[...].astype(jnp.bfloat16)                       # (tm, img_dim)
    h = jnp.dot(x, w1_ref[...], preferred_element_type=jnp.float32)

    # Class bias rebuilt in-kernel: one_hot(labels) @ cls_table, all in f32
    # (cls_table already folds embedding @ W1_emb + b1).
    tm = lbl_ref.shape[0]
    n_classes = cls_ref.shape[0]
    iota = jax.lax.broadcasted_iota(jnp.int32, (tm, n_classes), 1)
    onehot = (iota == lbl_ref[...]).astype(jnp.float32)          # (tm, n_classes)
    cb = jnp.dot(onehot, cls_ref[...], preferred_element_type=jnp.float32)
    h = _leaky_relu(h + cb)                                      # f32 on the VPU

    h = jnp.dot(h.astype(jnp.bfloat16), w2_ref[...],
                preferred_element_type=jnp.float32) + b2_ref[...]
    h = _leaky_relu(h)

    h = jnp.dot(h.astype(jnp.bfloat16), w3_ref[...],
                preferred_element_type=jnp.float32) + b3_ref[...]
    h = _leaky_relu(h)

    h = jnp.dot(h.astype(jnp.bfloat16), w4_ref[...],
                preferred_element_type=jnp.float32) + b4_ref[...]
    h = _leaky_relu(h)

    # Layer 5 (K=64, N=1): VPU multiply + XLU lane reduce instead of a nearly
    # empty MXU tile.  bf16 round-trip keeps products identical to a bf16
    # matmul with f32 accumulation.
    h_b = h.astype(jnp.bfloat16).astype(jnp.float32)             # (tm, 64)
    w5 = w5t_ref[...].astype(jnp.float32)                        # (1, 64)
    v = jnp.sum(h_b * w5, axis=-1, keepdims=True) + b5_ref[...]
    out_ref[...] = v.astype(out_ref.dtype)


def _choose_tiling(B, block_batch):
    """Pick (tm, padded_B).  Small batches -> one full-array tile, no padding.
    Large batches -> 256-aligned tiles with >= 2 grid steps (v7x megacore)."""
    if B <= 512:
        return B, B
    tm = min(block_batch, _round_up((B + 1) // 2, 256))
    tm = max(tm, 256)
    return tm, _round_up(B, tm)


def discriminator_forward(img, labels, params, *, block_batch=1024):
    """img: (B, C, H, W) float32, labels: (B,) int32 -> (B, 1) float32."""
    B = img.shape[0]
    img_dim = int(img.size // B)                                 # C*H*W
    img_2d = img.reshape(B, img_dim)                             # f32, no copy
    labels_2d = labels.reshape(B, 1).astype(jnp.int32)

    # Fold (embedding @ W1_emb + b1) into a per-class bias table once (tiny,
    # n_classes x 512, kept in f32 and VMEM-resident inside the kernel).
    w1 = params["w1"]                                            # (img_dim + n_classes, 512) bf16
    w1_img = w1[:img_dim]                                        # (img_dim, 512) bf16
    w1_emb = w1[img_dim:]                                        # (n_classes, 512) bf16
    cls_table = jnp.dot(params["embedding"].astype(jnp.bfloat16), w1_emb,
                        preferred_element_type=jnp.float32) + params["b1"]

    tm, Bp = _choose_tiling(B, block_batch)
    if Bp != B:
        img_2d = jnp.pad(img_2d, ((0, Bp - B), (0, 0)))
        labels_2d = jnp.pad(labels_2d, ((0, Bp - B), (0, 0)))

    def batch_spec(cols):
        return pl.BlockSpec((tm, cols), lambda i: (i, 0))

    def resident(arr):
        # Constant block index -> stays VMEM-resident across all grid steps.
        return pl.BlockSpec(arr.shape, lambda i: (0, 0))

    w2, b2 = params["w2"], params["b2"]
    w3, b3 = params["w3"], params["b3"]
    w4, b4 = params["w4"], params["b4"]
    w5t = params["w5"].reshape(1, 64)                            # (1, 64) bf16
    b5 = params["b5"]
    n_classes = cls_table.shape[0]

    weight_bytes = sum(int(a.size) * a.dtype.itemsize
                       for a in (w1_img, cls_table, w2, b2, w3, b3, w4, b4, w5t, b5))
    flops = 2 * Bp * (img_dim * 512 + n_classes * 512 + 512 * 256
                      + 256 * 128 + 128 * 64 + 64)
    bytes_accessed = Bp * (img_dim * 4 + 4 + 4) + weight_bytes

    out = pl.pallas_call(
        discriminator_mlp_kernel,
        out_shape=jax.ShapeDtypeStruct((Bp, 1), jnp.float32),
        grid=(Bp // tm,),
        in_specs=[
            batch_spec(img_dim),                 # img tile (f32)
            batch_spec(1),                       # labels tile (int32)
            resident(cls_table),                 # per-class bias table (f32)
            resident(w1_img),
            resident(w2), resident(b2),
            resident(w3), resident(b3),
            resident(w4), resident(b4),
            resident(w5t), resident(b5),
        ],
        out_specs=pl.BlockSpec((tm, 1), lambda i: (i, 0)),
        compiler_params=pltpu.CompilerParams(
            dimension_semantics=("parallel",)),
        cost_estimate=pl.CostEstimate(
            flops=flops, transcendentals=0, bytes_accessed=bytes_accessed),
    )(img_2d, labels_2d, cls_table, w1_img, w2, b2, w3, b3, w4, b4, w5t, b5)
    return out[:B]


def init_params(key, n_classes, img_dim):
    """Shapes match the PyTorch module; Linear weights stored (in, out) in bf16,
    biases (1, out) in f32, embedding (n_classes, n_classes) in f32."""
    in_dim = n_classes + img_dim
    sizes = [(in_dim, 512), (512, 256), (256, 128), (128, 64), (64, 1)]
    params = {}
    key, ek = jax.random.split(key)
    params["embedding"] = jax.random.normal(ek, (n_classes, n_classes), jnp.float32)
    for i, (fan_in, fan_out) in enumerate(sizes, start=1):
        key, wk, bk = jax.random.split(key, 3)
        bound = 1.0 / float(fan_in) ** 0.5
        params[f"w{i}"] = jax.random.uniform(
            wk, (fan_in, fan_out), jnp.float32, -bound, bound).astype(jnp.bfloat16)
        params[f"b{i}"] = jax.random.uniform(
            bk, (1, fan_out), jnp.float32, -bound, bound)
    return params


if __name__ == "__main__":
    # Small shapes consistent with the module: batch=2, img_shape=(1,16,16), n_classes=10
    B, C, H, W = 2, 1, 16, 16
    n_classes = 10
    img_dim = C * H * W                                          # 256 (lane-aligned K)

    key = jax.random.PRNGKey(0)
    key, ik, lk, pk = jax.random.split(key, 4)
    img = jax.random.normal(ik, (B, C, H, W), jnp.float32)
    labels = jax.random.randint(lk, (B,), 0, n_classes, jnp.int32)
    params = init_params(pk, n_classes, img_dim)

    fwd = jax.jit(functools.partial(discriminator_forward, block_batch=1024))
    validity = fwd(img, labels, params)
    jax.block_until_ready(validity)

    # Pure-JAX reference with the same bf16-weight / f32-accumulate semantics.
    def ref_forward(img, labels, p):
        x = jnp.concatenate([img.reshape(img.shape[0], -1),
                             p["embedding"][labels]], axis=-1)
        for i in range(1, 6):
            x = jnp.dot(x.astype(jnp.bfloat16), p[f"w{i}"],
                        preferred_element_type=jnp.float32) + p[f"b{i}"]
            if i < 5:
                x = jnp.where(x > 0, x, 0.2 * x)
        return x

    ref = ref_forward(img, labels, params)
    assert validity.shape == (B, 1)
    assert jnp.allclose(validity, ref, atol=2e-3, rtol=2e-3), (
        jnp.max(jnp.abs(validity - ref)))

    print("KERNEL_OK")
</pallas_src>

<mosaic_0001>
module attributes {stable_mosaic.version = 11 : i64} {
  func.func @discriminator_mlp_kernel(%arg0: i32, %arg1: memref<2x256xf32, #tpu.memory_space<vmem>>, %arg2: memref<2x1xi32, #tpu.memory_space<vmem>>, %arg3: memref<10x512xf32, #tpu.memory_space<vmem>>, %arg4: memref<256x512xbf16, #tpu.memory_space<vmem>>, %arg5: memref<512x256xbf16, #tpu.memory_space<vmem>>, %arg6: memref<1x256xf32, #tpu.memory_space<vmem>>, %arg7: memref<256x128xbf16, #tpu.memory_space<vmem>>, %arg8: memref<1x128xf32, #tpu.memory_space<vmem>>, %arg9: memref<128x64xbf16, #tpu.memory_space<vmem>>, %arg10: memref<1x64xf32, #tpu.memory_space<vmem>>, %arg11: memref<1x64xbf16, #tpu.memory_space<vmem>>, %arg12: memref<1x1xf32, #tpu.memory_space<vmem>>, %arg13: memref<2x1xf32, #tpu.memory_space<vmem>>) attributes {dimension_semantics = [#tpu.dimension_semantics<parallel>], iteration_bounds = array<i64: 1>, scalar_prefetch = 0 : i64, scratch_operands = 0 : i64, tpu.core_type = #tpu.core_type<tc>, window_params = [{transform_indices = @transform_0, window_bounds = array<i64: 2, 256>}, {transform_indices = @transform_1, window_bounds = array<i64: 2, 1>}, {pipeline_mode = #tpu.pipeline_mode<synchronous>, transform_indices = @transform_2, window_bounds = array<i64: 10, 512>}, {pipeline_mode = #tpu.pipeline_mode<synchronous>, transform_indices = @transform_3, window_bounds = array<i64: 256, 512>}, {pipeline_mode = #tpu.pipeline_mode<synchronous>, transform_indices = @transform_4, window_bounds = array<i64: 512, 256>}, {pipeline_mode = #tpu.pipeline_mode<synchronous>, transform_indices = @transform_5, window_bounds = array<i64: 1, 256>}, {pipeline_mode = #tpu.pipeline_mode<synchronous>, transform_indices = @transform_6, window_bounds = array<i64: 256, 128>}, {pipeline_mode = #tpu.pipeline_mode<synchronous>, transform_indices = @transform_7, window_bounds = array<i64: 1, 128>}, {pipeline_mode = #tpu.pipeline_mode<synchronous>, transform_indices = @transform_8, window_bounds = array<i64: 128, 64>}, {pipeline_mode = #tpu.pipeline_mode<synchronous>, transform_indices = @transform_9, window_bounds = array<i64: 1, 64>}, {pipeline_mode = #tpu.pipeline_mode<synchronous>, transform_indices = @transform_10, window_bounds = array<i64: 1, 64>}, {pipeline_mode = #tpu.pipeline_mode<synchronous>, transform_indices = @transform_11, window_bounds = array<i64: 1, 1>}, {transform_indices = @transform_12, window_bounds = array<i64: 2, 1>}]} {
    %c0 = arith.constant 0 : index
    %c0_0 = arith.constant 0 : index
    %0 = vector.load %arg1[%c0, %c0_0] : memref<2x256xf32, #tpu.memory_space<vmem>>, vector<2x256xf32>
    %1 = arith.truncf %0 : vector<2x256xf32> to vector<2x256xbf16>
    %c0_1 = arith.constant 0 : index
    %c0_2 = arith.constant 0 : index
    %2 = vector.load %arg4[%c0_1, %c0_2] : memref<256x512xbf16, #tpu.memory_space<vmem>>, vector<256x512xbf16>
    %cst = arith.constant dense<0.000000e+00> : vector<2x512xf32>
    %3 = tpu.matmul %1, %2, %cst {dimension_numbers = #tpu.dot_dimension_numbers<[1], [0], [0], [1], [0, 0, 1, 1], [], []>} : vector<2x256xbf16>, vector<256x512xbf16>, vector<2x512xf32> -> vector<2x512xf32>
    %4 = tpu.iota {dimensions = array<i32: 1>} : vector<2x10xi32>
    %c0_3 = arith.constant 0 : index
    %c0_4 = arith.constant 0 : index
    %5 = vector.load %arg2[%c0_3, %c0_4] : memref<2x1xi32, #tpu.memory_space<vmem>>, vector<2x1xi32>
    %6 = vector.broadcast %5 : vector<2x1xi32> to vector<2x10xi32>
    %7 = arith.cmpi eq, %4, %6 : vector<2x10xi32>
    %8 = arith.extui %7 : vector<2x10xi1> to vector<2x10xi32>
    %9 = arith.sitofp %8 : vector<2x10xi32> to vector<2x10xf32>
    %c0_5 = arith.constant 0 : index
    %c0_6 = arith.constant 0 : index
    %10 = vector.load %arg3[%c0_5, %c0_6] : memref<10x512xf32, #tpu.memory_space<vmem>>, vector<10x512xf32>
    %cst_7 = arith.constant dense<0.000000e+00> : vector<2x512xf32>
    %11 = tpu.matmul %9, %10, %cst_7 {dimension_numbers = #tpu.dot_dimension_numbers<[1], [0], [0], [1], [0, 0, 1, 1], [], []>} : vector<2x10xf32>, vector<10x512xf32>, vector<2x512xf32> -> vector<2x512xf32>
    %12 = arith.addf %3, %11 : vector<2x512xf32>
    %cst_8 = arith.constant 0.000000e+00 : f32
    %13 = vector.broadcast %cst_8 : f32 to vector<2x512xf32>
    %14 = arith.cmpf ogt, %12, %13 : vector<2x512xf32>
    %cst_9 = arith.constant 2.000000e-01 : f32
    %15 = vector.broadcast %cst_9 : f32 to vector<2x512xf32>
    %16 = arith.mulf %15, %12 : vector<2x512xf32>
    %17 = arith.select %14, %12, %16 : vector<2x512xi1>, vector<2x512xf32>
    %18 = arith.truncf %17 : vector<2x512xf32> to vector<2x512xbf16>
    %c0_10 = arith.constant 0 : index
    %c0_11 = arith.constant 0 : index
    %19 = vector.load %arg5[%c0_10, %c0_11] : memref<512x256xbf16, #tpu.memory_space<vmem>>, vector<512x256xbf16>
    %cst_12 = arith.constant dense<0.000000e+00> : vector<2x256xf32>
    %20 = tpu.matmul %18, %19, %cst_12 {dimension_numbers = #tpu.dot_dimension_numbers<[1], [0], [0], [1], [0, 0, 1, 1], [], []>} : vector<2x512xbf16>, vector<512x256xbf16>, vector<2x256xf32> -> vector<2x256xf32>
    %c0_13 = arith.constant 0 : index
    %c0_14 = arith.constant 0 : index
    %21 = vector.load %arg6[%c0_13, %c0_14] : memref<1x256xf32, #tpu.memory_space<vmem>>, vector<1x256xf32>
    %22 = vector.broadcast %21 : vector<1x256xf32> to vector<2x256xf32>
    %23 = arith.addf %20, %22 : vector<2x256xf32>
    %cst_15 = arith.constant 0.000000e+00 : f32
    %24 = vector.broadcast %cst_15 : f32 to vector<2x256xf32>
    %25 = arith.cmpf ogt, %23, %24 : vector<2x256xf32>
    %cst_16 = arith.constant 2.000000e-01 : f32
    %26 = vector.broadcast %cst_16 : f32 to vector<2x256xf32>
    %27 = arith.mulf %26, %23 : vector<2x256xf32>
    %28 = arith.select %25, %23, %27 : vector<2x256xi1>, vector<2x256xf32>
    %29 = arith.truncf %28 : vector<2x256xf32> to vector<2x256xbf16>
    %c0_17 = arith.constant 0 : index
    %c0_18 = arith.constant 0 : index
    %30 = vector.load %arg7[%c0_17, %c0_18] : memref<256x128xbf16, #tpu.memory_space<vmem>>, vector<256x128xbf16>
    %cst_19 = arith.constant dense<0.000000e+00> : vector<2x128xf32>
    %31 = tpu.matmul %29, %30, %cst_19 {dimension_numbers = #tpu.dot_dimension_numbers<[1], [0], [0], [1], [0, 0, 1, 1], [], []>} : vector<2x256xbf16>, vector<256x128xbf16>, vector<2x128xf32> -> vector<2x128xf32>
    %c0_20 = arith.constant 0 : index
    %c0_21 = arith.constant 0 : index
    %32 = vector.load %arg8[%c0_20, %c0_21] : memref<1x128xf32, #tpu.memory_space<vmem>>, vector<1x128xf32>
    %33 = vector.broadcast %32 : vector<1x128xf32> to vector<2x128xf32>
    %34 = arith.addf %31, %33 : vector<2x128xf32>
    %cst_22 = arith.constant 0.000000e+00 : f32
    %35 = vector.broadcast %cst_22 : f32 to vector<2x128xf32>
    %36 = arith.cmpf ogt, %34, %35 : vector<2x128xf32>
    %cst_23 = arith.constant 2.000000e-01 : f32
    %37 = vector.broadcast %cst_23 : f32 to vector<2x128xf32>
    %38 = arith.mulf %37, %34 : vector<2x128xf32>
    %39 = arith.select %36, %34, %38 : vector<2x128xi1>, vector<2x128xf32>
    %40 = arith.truncf %39 : vector<2x128xf32> to vector<2x128xbf16>
    %c0_24 = arith.constant 0 : index
    %c0_25 = arith.constant 0 : index
    %41 = vector.load %arg9[%c0_24, %c0_25] : memref<128x64xbf16, #tpu.memory_space<vmem>>, vector<128x64xbf16>
    %cst_26 = arith.constant dense<0.000000e+00> : vector<2x64xf32>
    %42 = tpu.matmul %40, %41, %cst_26 {dimension_numbers = #tpu.dot_dimension_numbers<[1], [0], [0], [1], [0, 0, 1, 1], [], []>} : vector<2x128xbf16>, vector<128x64xbf16>, vector<2x64xf32> -> vector<2x64xf32>
    %c0_27 = arith.constant 0 : index
    %c0_28 = arith.constant 0 : index
    %43 = vector.load %arg10[%c0_27, %c0_28] : memref<1x64xf32, #tpu.memory_space<vmem>>, vector<1x64xf32>
    %44 = vector.broadcast %43 : vector<1x64xf32> to vector<2x64xf32>
    %45 = arith.addf %42, %44 : vector<2x64xf32>
    %cst_29 = arith.constant 0.000000e+00 : f32
    %46 = vector.broadcast %cst_29 : f32 to vector<2x64xf32>
    %47 = arith.cmpf ogt, %45, %46 : vector<2x64xf32>
    %cst_30 = arith.constant 2.000000e-01 : f32
    %48 = vector.broadcast %cst_30 : f32 to vector<2x64xf32>
    %49 = arith.mulf %48, %45 : vector<2x64xf32>
    %50 = arith.select %47, %45, %49 : vector<2x64xi1>, vector<2x64xf32>
    %51 = arith.truncf %50 : vector<2x64xf32> to vector<2x64xbf16>
    %52 = arith.extf %51 : vector<2x64xbf16> to vector<2x64xf32>
    %c0_31 = arith.constant 0 : index
    %c0_32 = arith.constant 0 : index
    %53 = vector.load %arg11[%c0_31, %c0_32] : memref<1x64xbf16, #tpu.memory_space<vmem>>, vector<1x64xbf16>
    %54 = arith.extf %53 : vector<1x64xbf16> to vector<1x64xf32>
    %55 = vector.broadcast %54 : vector<1x64xf32> to vector<2x64xf32>
    %56 = arith.mulf %52, %55 : vector<2x64xf32>
    %cst_33 = arith.constant dense<0.000000e+00> : vector<2xf32>
    %57 = vector.multi_reduction <add>, %56, %cst_33 [1] : vector<2x64xf32> to vector<2xf32>
    %58 = vector.shape_cast %57 : vector<2xf32> to vector<2x1xf32>
    %c0_34 = arith.constant 0 : index
    %c0_35 = arith.constant 0 : index
    %59 = vector.load %arg12[%c0_34, %c0_35] : memref<1x1xf32, #tpu.memory_space<vmem>>, vector<1x1xf32>
    %60 = vector.broadcast %59 : vector<1x1xf32> to vector<2x1xf32>
    %61 = arith.addf %58, %60 : vector<2x1xf32>
    %c0_36 = arith.constant 0 : index
    %c0_37 = arith.constant 0 : index
    %62 = vector.load %arg13[%c0_36, %c0_37] : memref<2x1xf32, #tpu.memory_space<vmem>>, vector<2x1xf32>
    tpu.vector_store %arg13[%c0_36, %c0_37], %61 {strides = array<i32>} : memref<2x1xf32, #tpu.memory_space<vmem>>, vector<2x1xf32>,
    return
  }
  func.func @transform_0(%arg0: i32) -> (i32, i32) {
    %c0_i32 = arith.constant 0 : i32
    %c0_i32_0 = arith.constant 0 : i32
    return %arg0, %c0_i32 : i32, i32
  }
  func.func @transform_1(%arg0: i32) -> (i32, i32) {
    %c0_i32 = arith.constant 0 : i32
    %c0_i32_0 = arith.constant 0 : i32
    return %arg0, %c0_i32 : i32, i32
  }
  func.func @transform_2(%arg0: i32) -> (i32, i32) {
    %c0_i32 = arith.constant 0 : i32
    %c0_i32_0 = arith.constant 0 : i32
    %c0_i32_1 = arith.constant 0 : i32
    return %c0_i32, %c0_i32_0 : i32, i32
  }
  func.func @transform_3(%arg0: i32) -> (i32, i32) {
    %c0_i32 = arith.constant 0 : i32
    %c0_i32_0 = arith.constant 0 : i32
    %c0_i32_1 = arith.constant 0 : i32
    return %c0_i32, %c0_i32_0 : i32, i32
  }
  func.func @transform_4(%arg0: i32) -> (i32, i32) {
    %c0_i32 = arith.constant 0 : i32
    %c0_i32_0 = arith.constant 0 : i32
    %c0_i32_1 = arith.constant 0 : i32
    return %c0_i32, %c0_i32_0 : i32, i32
  }
  func.func @transform_5(%arg0: i32) -> (i32, i32) {
    %c0_i32 = arith.constant 0 : i32
    %c0_i32_0 = arith.constant 0 : i32
    %c0_i32_1 = arith.constant 0 : i32
    return %c0_i32, %c0_i32_0 : i32, i32
  }
  func.func @transform_6(%arg0: i32) -> (i32, i32) {
    %c0_i32 = arith.constant 0 : i32
    %c0_i32_0 = arith.constant 0 : i32
    %c0_i32_1 = arith.constant 0 : i32
    return %c0_i32, %c0_i32_0 : i32, i32
  }
  func.func @transform_7(%arg0: i32) -> (i32, i32) {
    %c0_i32 = arith.constant 0 : i32
    %c0_i32_0 = arith.constant 0 : i32
    %c0_i32_1 = arith.constant 0 : i32
    return %c0_i32, %c0_i32_0 : i32, i32
  }
  func.func @transform_8(%arg0: i32) -> (i32, i32) {
    %c0_i32 = arith.constant 0 : i32
    %c0_i32_0 = arith.constant 0 : i32
    %c0_i32_1 = arith.constant 0 : i32
    return %c0_i32, %c0_i32_0 : i32, i32
  }
  func.func @transform_9(%arg0: i32) -> (i32, i32) {
    %c0_i32 = arith.constant 0 : i32
    %c0_i32_0 = arith.constant 0 : i32
    %c0_i32_1 = arith.constant 0 : i32
    return %c0_i32, %c0_i32_0 : i32, i32
  }
  func.func @transform_10(%arg0: i32) -> (i32, i32) {
    %c0_i32 = arith.constant 0 : i32
    %c0_i32_0 = arith.constant 0 : i32
    %c0_i32_1 = arith.constant 0 : i32
    return %c0_i32, %c0_i32_0 : i32, i32
  }
  func.func @transform_11(%arg0: i32) -> (i32, i32) {
    %c0_i32 = arith.constant 0 : i32
    %c0_i32_0 = arith.constant 0 : i32
    %c0_i32_1 = arith.constant 0 : i32
    return %c0_i32, %c0_i32_0 : i32, i32
  }
  func.func @transform_12(%arg0: i32) -> (i32, i32) {
    %c0_i32 = arith.constant 0 : i32
    %c0_i32_0 = arith.constant 0 : i32
    return %arg0, %c0_i32 : i32, i32
  }
}

</mosaic_0001>

<llo_original>
// kernel: discriminator_forward.1
$region0: #{discriminator_forward.1}
  #allocation0 [shape = 'u32[]', space=smem, size = 0x4, offset = 0x4, fixed_abs, tag = 'smem constant byte address 0x4 - core index']
  #allocation1 [shape = 'u32[144,128]{1,0:T(1,128)}', space=vmem, size = 0x12000, scoped, tag = 'internal scratch']
  #allocation2 [shape = 'f32[1,1]{1,0:T(1,128)S(1)}', space=vmem, size = 0x200, scoped, tag = 'scoped memory for discriminator_forward.1']
  %s0 = inlined_call_operand.vmem [shape: f32[2,256], index: 0, kind: input, shape index: {}]
  %s1 = inlined_call_operand.vmem [shape: s32[2,1], index: 1, kind: input, shape index: {}]
  %s2 = inlined_call_operand.vmem [shape: f32[10,512], index: 2, kind: input, shape index: {}]
  %s3 = inlined_call_operand.vmem [shape: bf16[256,512], index: 3, kind: input, shape index: {}]
  %s4 = inlined_call_operand.vmem [shape: bf16[512,256], index: 4, kind: input, shape index: {}]
  %s5 = inlined_call_operand.vmem [shape: f32[1,256], index: 5, kind: input, shape index: {}]
  %s6 = inlined_call_operand.vmem [shape: bf16[256,128], index: 6, kind: input, shape index: {}]
  %s7 = inlined_call_operand.vmem [shape: f32[1,128], index: 7, kind: input, shape index: {}]
  %s8 = inlined_call_operand.vmem [shape: bf16[128,64], index: 8, kind: input, shape index: {}]
  %s9 = inlined_call_operand.vmem [shape: f32[1,64], index: 9, kind: input, shape index: {}]
  %s10 = inlined_call_operand.vmem [shape: bf16[1,64], index: 10, kind: input, shape index: {}]
  %s11 = inlined_call_operand.<no memory space> [shape: f32[1,1], index: 11, kind: input, shape index: {}]
  %s12 = inlined_call_operand.vmem [shape: f32[2,1], index: 12, kind: output, shape index: {}]
  %s13 = sld [smem:[#allocation0]]
  $region58: #{discriminator_forward.1} parent=0
    _
  %s15 = ssub.s32 1, %s13
  %s16 = scalar_select 0, %s15, %s13
  %v17 = vstv %s11
  %18 = vst [vmem:[#allocation2] sm:$0x1] %v17
  // Predicated region
  $region2: #{discriminator_forward.1} parent=0 // pred_check
    _
  $region3: #{discriminator_forward.1} parent=0 // pred_check_branch
    %20 = sbr.rel (0) target = $region5
  $region4: #{discriminator_forward.1} parent=0 // pred_region
    _
  $region5: #{discriminator_forward.1} parent=0 // pred_fallthru
    _
  // Predicated region
  $region6: #{discriminator_forward.1} parent=0 // pred_check
    _
  $region7: #{discriminator_forward.1} parent=0 // pred_check_branch
    %22 = sbr.rel (0) target = $region9
  $region8: #{discriminator_forward.1} parent=0 // pred_region
    _
  $region9: #{discriminator_forward.1} parent=0 // pred_fallthru
    _
  // Predicated region
  $region10: #{discriminator_forward.1} parent=0 // pred_check
    _
  $region11: #{discriminator_forward.1} parent=0 // pred_check_branch
    %24 = sbr.rel (0) target = $region13
  $region12: #{discriminator_forward.1} parent=0 // pred_region
    _
  $region13: #{discriminator_forward.1} parent=0 // pred_fallthru
    _
  // Predicated region
  $region14: #{discriminator_forward.1} parent=0 // pred_check
    _
  $region15: #{discriminator_forward.1} parent=0 // pred_check_branch
    %26 = sbr.rel (0) target = $region17
  $region16: #{discriminator_forward.1} parent=0 // pred_region
    _
  $region17: #{discriminator_forward.1} parent=0 // pred_fallthru
    _
  // Predicated region
  $region18: #{discriminator_forward.1} parent=0 // pred_check
    _
  $region19: #{discriminator_forward.1} parent=0 // pred_check_branch
    %28 = sbr.rel (0) target = $region21
  $region20: #{discriminator_forward.1} parent=0 // pred_region
    _
  $region21: #{discriminator_forward.1} parent=0 // pred_fallthru
    _
  // Predicated region
  $region22: #{discriminator_forward.1} parent=0 // pred_check
    _
  $region23: #{discriminator_forward.1} parent=0 // pred_check_branch
    %30 = sbr.rel (0) target = $region25
  $region24: #{discriminator_forward.1} parent=0 // pred_region
    _
  $region25: #{discriminator_forward.1} parent=0 // pred_fallthru
    _
  // Predicated region
  $region26: #{discriminator_forward.1} parent=0 // pred_check
    _
  $region27: #{discriminator_forward.1} parent=0 // pred_check_branch
    %32 = sbr.rel (0) target = $region29
  $region28: #{discriminator_forward.1} parent=0 // pred_region
    _
  $region29: #{discriminator_forward.1} parent=0 // pred_fallthru
    _
  // Predicated region
  $region30: #{discriminator_forward.1} parent=0 // pred_check
    _
  $region31: #{discriminator_forward.1} parent=0 // pred_check_branch
    %34 = sbr.rel (0) target = $region33
  $region32: #{discriminator_forward.1} parent=0 // pred_region
    _
  $region33: #{discriminator_forward.1} parent=0 // pred_fallthru
    _
  // Predicated region
  $region34: #{discriminator_forward.1} parent=0 // pred_check
    _
  $region35: #{discriminator_forward.1} parent=0 // pred_check_branch
    %36 = sbr.rel (0) target = $region37
  $region36: #{discriminator_forward.1} parent=0 // pred_region
    _
  $region37: #{discriminator_forward.1} parent=0 // pred_fallthru
    _
  // Predicated region
  $region38: #{discriminator_forward.1} parent=0 // pred_check
    _
  $region39: #{discriminator_forward.1} parent=0 // pred_check_branch
    %38 = sbr.rel (0) target = $region41
  $region40: #{discriminator_forward.1} parent=0 // pred_region
    _
  $region41: #{discriminator_forward.1} parent=0 // pred_fallthru
    _
  // Predicated region
  $region42: #{discriminator_forward.1} parent=0 // pred_check
    _
  $region43: #{discriminator_forward.1} parent=0 // pred_check_branch
    %40 = sbr.rel (0) target = $region45
  $region44: #{discriminator_forward.1} parent=0 // pred_region
    _
  $region45: #{discriminator_forward.1} parent=0 // pred_fallthru
    _
  // Predicated region
  $region46: #{discriminator_forward.1} parent=0 // pred_check
    _
  $region47: #{discriminator_forward.1} parent=0 // pred_check_branch
    %42 = sbr.rel (0) target = $region49
  $region48: #{discriminator_forward.1} parent=0 // pred_region
    _
  $region49: #{discriminator_forward.1} parent=0 // pred_fallthru
    _
  %v44 = vld [vmem:[%s0] sm:$0xf]
  %v47 = vunpack.c.l.s4 1983009808
  %v48 = vunpack.c.0.s8 %v47
  %v49 = vlaneseq
  %v50 = vshrl.u32 %v49, 7
  %v51 = vsub.s32 %v48, %v50
  %v52 = vrot.slane %v44, %v51
  %v53 = vcombine.high %v52, %v52
  %v56 = vpack.c.bf16 %v52, %v52
  %v57 = vpack.c.bf16 %v53, %v53
  %v58 = vld [vmem:[%s3] sm:$0xff]
  %v59 = vld [vmem:[%s3 + $0x8] sm:$0xff]
  %v60 = vld [vmem:[%s3 + $0x10] sm:$0xff]
  %v61 = vld [vmem:[%s3 + $0x18] sm:$0xff]
  %v62 = vld [vmem:[%s3 + $0x20] sm:$0xff]
  %v63 = vld [vmem:[%s3 + $0x28] sm:$0xff]
  %v64 = vld [vmem:[%s3 + $0x30] sm:$0xff]
  %v65 = vld [vmem:[%s3 + $0x38] sm:$0xff]
  %v66 = vld [vmem:[%s3 + $0x40] sm:$0xff]
  %v67 = vld [vmem:[%s3 + $0x48] sm:$0xff]
  %v68 = vld [vmem:[%s3 + $0x50] sm:$0xff]
  %v69 = vld [vmem:[%s3 + $0x58] sm:$0xff]
  %v70 = vld [vmem:[%s3 + $0x60] sm:$0xff]
  %v71 = vld [vmem:[%s3 + $0x68] sm:$0xff]
  %v72 = vld [vmem:[%s3 + $0x70] sm:$0xff]
  %v73 = vld [vmem:[%s3 + $0x78] sm:$0xff]
  %v74 = vld [vmem:[%s3 + $0x80] sm:$0xff]
  %v75 = vld [vmem:[%s3 + $0x88] sm:$0xff]
  %v76 = vld [vmem:[%s3 + $0x90] sm:$0xff]
  %v77 = vld [vmem:[%s3 + $0x98] sm:$0xff]
  %v78 = vld [vmem:[%s3 + $0xa0] sm:$0xff]
  %v79 = vld [vmem:[%s3 + $0xa8] sm:$0xff]
  %v80 = vld [vmem:[%s3 + $0xb0] sm:$0xff]
  %v81 = vld [vmem:[%s3 + $0xb8] sm:$0xff]
  %v82 = vld [vmem:[%s3 + $0xc0] sm:$0xff]
  %v83 = vld [vmem:[%s3 + $0xc8] sm:$0xff]
  %v84 = vld [vmem:[%s3 + $0xd0] sm:$0xff]
  %v85 = vld [vmem:[%s3 + $0xd8] sm:$0xff]
  %v86 = vld [vmem:[%s3 + $0xe0] sm:$0xff]
  %v87 = vld [vmem:[%s3 + $0xe8] sm:$0xff]
  %v88 = vld [vmem:[%s3 + $0xf0] sm:$0xff]
  %v89 = vld [vmem:[%s3 + $0xf8] sm:$0xff]
  %v90 = vld [vmem:[%s3 + $0x100] sm:$0xff]
  %v91 = vld [vmem:[%s3 + $0x108] sm:$0xff]
  %v92 = vld [vmem:[%s3 + $0x110] sm:$0xff]
  %v93 = vld [vmem:[%s3 + $0x118] sm:$0xff]
  %v94 = vld [vmem:[%s3 + $0x120] sm:$0xff]
  %v95 = vld [vmem:[%s3 + $0x128] sm:$0xff]
  %v96 = vld [vmem:[%s3 + $0x130] sm:$0xff]
  %v97 = vld [vmem:[%s3 + $0x138] sm:$0xff]
  %v98 = vld [vmem:[%s3 + $0x140] sm:$0xff]
  %v99 = vld [vmem:[%s3 + $0x148] sm:$0xff]
  %v100 = vld [vmem:[%s3 + $0x150] sm:$0xff]
  %v101 = vld [vmem:[%s3 + $0x158] sm:$0xff]
  %v102 = vld [vmem:[%s3 + $0x160] sm:$0xff]
  %v103 = vld [vmem:[%s3 + $0x168] sm:$0xff]
  %v104 = vld [vmem:[%s3 + $0x170] sm:$0xff]
  %v105 = vld [vmem:[%s3 + $0x178] sm:$0xff]
  %v106 = vld [vmem:[%s3 + $0x180] sm:$0xff]
  %v107 = vld [vmem:[%s3 + $0x188] sm:$0xff]
  %v108 = vld [vmem:[%s3 + $0x190] sm:$0xff]
  %v109 = vld [vmem:[%s3 + $0x198] sm:$0xff]
  %v110 = vld [vmem:[%s3 + $0x1a0] sm:$0xff]
  %v111 = vld [vmem:[%s3 + $0x1a8] sm:$0xff]
  %v112 = vld [vmem:[%s3 + $0x1b0] sm:$0xff]
  %v113 = vld [vmem:[%s3 + $0x1b8] sm:$0xff]
  %v114 = vld [vmem:[%s3 + $0x1c0] sm:$0xff]
  %v115 = vld [vmem:[%s3 + $0x1c8] sm:$0xff]
  %v116 = vld [vmem:[%s3 + $0x1d0] sm:$0xff]
  %v117 = vld [vmem:[%s3 + $0x1d8] sm:$0xff]
  %v118 = vld [vmem:[%s3 + $0x1e0] sm:$0xff]
  %v119 = vld [vmem:[%s3 + $0x1e8] sm:$0xff]
  %v120 = vld [vmem:[%s3 + $0x1f0] sm:$0xff]
  %v121 = vld [vmem:[%s3 + $0x1f8] sm:$0xff]
  %v122 = vlaneseq
  %v123 = vand.u32 %v122, 127
  %v124 = vld [vmem:[%s1] sm:$0x3]
  %125 = vset.pattern.permute.xlu0 0
  %126 = vperm.xlu0 %125, %v124
  %v127 = vpop.permute.xlu0 %126
  %vm128 = vcmp.eq.s32.totalorder %v123, %v127
  %v129 = vsel %vm128, 1, 0
  %v130 = vcvt.s32.f32 %v129
  %v131 = vld [vmem:[%s2] sm:$0xff]
  %v132 = vld [vmem:[%s2 + $0x8] sm:$0xff]
  %v133 = vld [vmem:[%s2 + $0x10] sm:$0xff]
  %v134 = vld [vmem:[%s2 + $0x18] sm:$0xff]
  %v135 = vld [vmem:[%s2 + $0x20] sm:$0x3]
  %v136 = vld [vmem:[%s2 + $0x28] sm:$0x3]
  %v137 = vld [vmem:[%s2 + $0x30] sm:$0x3]
  %v138 = vld [vmem:[%s2 + $0x38] sm:$0x3]
  %vm139 = vcmask 80896
  %v141 = vsel %vm139, %v130, 0
  %vm143 = vcmask 1041408
  %v145 = vsel %vm143, %v135, 0
  %v148 = vsel %vm143, %v136, 0
  %v151 = vsel %vm143, %v137, 0
  %v154 = vsel %vm143, %v138, 0
  %156 = vmatprep.subr.mxu0 %v132
  %157 = vmatpush1.msra.mxu0 %v131
  %158 = vmatprep.subr.mxu0 %v148
  %159 = vmatpush1.msra.mxu0 %v145
  %160 = vmatprep.subr.mxu0 0.0
  %161 = vmatpush1.msra.mxu0 0.0
  %162 = vmatprep.subr.mxu0 0.0
  %163 = vmatpush1.msra.mxu0 0.0
  %164 = vmatprep.subr.mxu0 0.0
  %165 = vmatpush1.msra.mxu0 0.0
  %166 = vmatprep.subr.mxu0 0.0
  %167 = vmatpush1.msra.mxu0 0.0
  %168 = vmatprep.subr.mxu0 0.0
  %169 = vmatpush1.msra.mxu0 0.0
  %170 = vmatprep.subr.mxu0 0.0
  %171 = vmatpush1.msra.mxu0 0.0
  %172 = vmatprep.subr.mxu0 0.0
  %173 = vmatpush1.msra.mxu0 0.0
  %174 = vmatprep.subr.mxu0 0.0
  %175 = vmatpush1.msra.mxu0 0.0
  %176 = vmatprep.subr.mxu0 0.0
  %177 = vmatpush1.msra.mxu0 0.0
  %178 = vmatprep.subr.mxu0 0.0
  %179 = vmatpush1.msra.mxu0 0.0
  %180 = vmatprep.subr.mxu0 0.0
  %181 = vmatpush1.msra.mxu0 0.0
  %182 = vmatprep.subr.mxu0 0.0
  %183 = vmatpush1.msra.mxu0 0.0
  %184 = vmatprep.subr.mxu0 0.0
  %185 = vmatpush1.msra.mxu0 0.0
  %186 = vmatprep.subr.mxu0 0.0
  %187 = vmatpush1.msra.mxu0 0.0
  %188 = vmatprep.subr.mxu0 0.0
  %189 = vmatpush1.msra.mxu0 0.0
  %190 = vmatprep.subr.mxu0 0.0
  %191 = vmatpush1.msra.mxu0 0.0
  %192 = vmatprep.subr.mxu0 0.0
  %193 = vmatpush1.msra.mxu0 0.0
  %194 = vmatprep.subr.mxu0 0.0
  %195 = vmatpush1.msra.mxu0 0.0
  %196 = vmatprep.subr.mxu0 0.0
  %197 = vmatpush1.msra.mxu0 0.0
  %198 = vmatprep.subr.mxu0 0.0
  %199 = vmatpush1.msra.mxu0 0.0
  %200 = vmatprep.subr.mxu0 0.0
  %201 = vmatpush1.msra.mxu0 0.0
  %202 = vmatprep.subr.mxu0 0.0
  %203 = vmatpush1.msra.mxu0 0.0
  %204 = vmatprep.subr.mxu0 0.0
  %205 = vmatpush1.msra.mxu0 0.0
  %206 = vmatprep.subr.mxu0 0.0
  %207 = vmatpush1.msra.mxu0 0.0
  %208 = vmatprep.subr.mxu0 0.0
  %209 = vmatpush1.msra.mxu0 0.0
  %210 = vmatprep.subr.mxu0 0.0
  %211 = vmatpush1.msra.mxu0 0.0
  %212 = vmatprep.subr.mxu0 0.0
  %213 = vmatpush1.msra.mxu0 0.0
  %214 = vmatprep.subr.mxu0 0.0
  %215 = vmatpush1.msra.mxu0 0.0
  %216 = vmatprep.subr.mxu0 0.0
  %217 = vmatpush1.msra.mxu0 0.0
  %218 = vmatprep.subr.mxu0 0.0
  %219 = vmatpush1.msra.mxu0 0.0
  %220 = vmatprep.mubr.f32.mxu0 0.0
  %221 = vmatmul.mubr.f32.gmra.mrb[0].mxu0 %v141
  %v222 = vpop.f32.mrb[0].mxu0
  %v223 = vadd.f32 0.0, %v222
  %v224 = vpop.f32.mrb[0].mxu0
  %v225 = vadd.f32 0.0, %v224
  %226 = vdwg.mxu0
  %227 = vmatprep.subr.mxu0 %v134
  %228 = vmatpush1.msra.mxu0 %v133
  %229 = vmatprep.subr.mxu0 %v154
  %230 = vmatpush1.msra.mxu0 %v151
  %231 = vmatprep.subr.mxu0 0.0
  %232 = vmatpush1.msra.mxu0 0.0
  %233 = vmatprep.subr.mxu0 0.0
  %234 = vmatpush1.msra.mxu0 0.0
  %235 = vmatprep.subr.mxu0 0.0
  %236 = vmatpush1.msra.mxu0 0.0
  %237 = vmatprep.subr.mxu0 0.0
  %238 = vmatpush1.msra.mxu0 0.0
  %239 = vmatprep.subr.mxu0 0.0
  %240 = vmatpush1.msra.mxu0 0.0
  %241 = vmatprep.subr.mxu0 0.0
  %242 = vmatpush1.msra.mxu0 0.0
  %243 = vmatprep.subr.mxu0 0.0
  %244 = vmatpush1.msra.mxu0 0.0
  %245 = vmatprep.subr.mxu0 0.0
  %246 = vmatpush1.msra.mxu0 0.0
  %247 = vmatprep.subr.mxu0 0.0
  %248 = vmatpush1.msra.mxu0 0.0
  %249 = vmatprep.subr.mxu0 0.0
  %250 = vmatpush1.msra.mxu0 0.0
  %251 = vmatprep.subr.mxu0 0.0
  %252 = vmatpush1.msra.mxu0 0.0
  %253 = vmatprep.subr.mxu0 0.0
  %254 = vmatpush1.msra.mxu0 0.0
  %255 = vmatprep.subr.mxu0 0.0
  %256 = vmatpush1.msra.mxu0 0.0
  %257 = vmatprep.subr.mxu0 0.0
  %258 = vmatpush1.msra.mxu0 0.0
  %259 = vmatprep.subr.mxu0 0.0
  %260 = vmatpush1.msra.mxu0 0.0
  %261 = vmatprep.subr.mxu0 0.0
  %262 = vmatpush1.msra.mxu0 0.0
  %263 = vmatprep.subr.mxu0 0.0
  %264 = vmatpush1.msra.mxu0 0.0
  %265 = vmatprep.subr.mxu0 0.0
  %266 = vmatpush1.msra.mxu0 0.0
  %267 = vmatprep.subr.mxu0 0.0
  %268 = vmatpush1.msra.mxu0 0.0
  %269 = vmatprep.subr.mxu0 0.0
  %270 = vmatpush1.msra.mxu0 0.0
  %271 = vmatprep.subr.mxu0 0.0
  %272 = vmatpush1.msra.mxu0 0.0
  %273 = vmatprep.subr.mxu0 0.0
  %274 = vmatpush1.msra.mxu0 0.0
  %275 = vmatprep.subr.mxu0 0.0
  %276 = vmatpush1.msra.mxu0 0.0
  %277 = vmatprep.subr.mxu0 0.0
  %278 = vmatpush1.msra.mxu0 0.0
  %279 = vmatprep.subr.mxu0 0.0
  %280 = vmatpush1.msra.mxu0 0.0
  %281 = vmatprep.subr.mxu0 0.0
  %282 = vmatpush1.msra.mxu0 0.0
  %283 = vmatprep.subr.mxu0 0.0
  %284 = vmatpush1.msra.mxu0 0.0
  %285 = vmatprep.subr.mxu0 0.0
  %286 = vmatpush1.msra.mxu0 0.0
  %287 = vmatprep.subr.mxu0 0.0
  %288 = vmatpush1.msra.mxu0 0.0
  %289 = vmatprep.subr.mxu0 0.0
  %290 = vmatpush1.msra.mxu0 0.0
  %291 = vmatprep.mubr.f32.mxu0 0.0
  %292 = vmatmul.mubr.f32.gmra.mrb[0].mxu0 %v141
  %v293 = vpop.f32.mrb[0].mxu0
  %v294 = vadd.f32 0.0, %v293
  %v295 = vpop.f32.mrb[0].mxu0
  %v296 = vadd.f32 0.0, %v295
  %297 = vdwg.mxu0
  %v362 = vunpack.c.l.b16 %v58
  %v363 = vunpack.c.h.b16 %v58
  %v364 = vunpack.c.l.b16 %v59
  %v365 = vunpack.c.h.b16 %v59
  %v366 = vunpack.c.l.b16 %v60
  %v367 = vunpack.c.h.b16 %v60
  %v368 = vunpack.c.l.b16 %v61
  %v369 = vunpack.c.h.b16 %v61
  %v370 = vunpack.c.l.b16 %v62
  %v371 = vunpack.c.h.b16 %v62
  %v372 = vunpack.c.l.b16 %v63
  %v373 = vunpack.c.h.b16 %v63
  %v374 = vunpack.c.l.b16 %v64
  %v375 = vunpack.c.h.b16 %v64
  %v376 = vunpack.c.l.b16 %v65
  %v377 = vunpack.c.h.b16 %v65
  %v378 = vunpack.c.l.b16 %v66
  %v379 = vunpack.c.h.b16 %v66
  %v380 = vunpack.c.l.b16 %v67
  %v381 = vunpack.c.h.b16 %v67
  %v382 = vunpack.c.l.b16 %v68
  %v383 = vunpack.c.h.b16 %v68
  %v384 = vunpack.c.l.b16 %v69
  %v385 = vunpack.c.h.b16 %v69
  %v386 = vunpack.c.l.b16 %v70
  %v387 = vunpack.c.h.b16 %v70
  %v388 = vunpack.c.l.b16 %v71
  %v389 = vunpack.c.h.b16 %v71
  %v390 = vunpack.c.l.b16 %v72
  %v391 = vunpack.c.h.b16 %v72
  %v392 = vunpack.c.l.b16 %v73
  %v393 = vunpack.c.h.b16 %v73
  %v394 = vunpack.c.l.b16 %v74
  %v395 = vunpack.c.h.b16 %v74
  %v396 = vunpack.c.l.b16 %v75
  %v397 = vunpack.c.h.b16 %v75
  %v398 = vunpack.c.l.b16 %v76
  %v399 = vunpack.c.h.b16 %v76
  %v400 = vunpack.c.l.b16 %v77
  %v401 = vunpack.c.h.b16 %v77
  %v402 = vunpack.c.l.b16 %v78
  %v403 = vunpack.c.h.b16 %v78
  %v404 = vunpack.c.l.b16 %v79
  %v405 = vunpack.c.h.b16 %v79
  %v406 = vunpack.c.l.b16 %v80
  %v407 = vunpack.c.h.b16 %v80
  %v408 = vunpack.c.l.b16 %v81
  %v409 = vunpack.c.h.b16 %v81
  %v410 = vunpack.c.l.b16 %v82
  %v411 = vunpack.c.h.b16 %v82
  %v412 = vunpack.c.l.b16 %v83
  %v413 = vunpack.c.h.b16 %v83
  %v414 = vunpack.c.l.b16 %v84
  %v415 = vunpack.c.h.b16 %v84
  %v416 = vunpack.c.l.b16 %v85
  %v417 = vunpack.c.h.b16 %v85
  %v418 = vunpack.c.l.b16 %v86
  %v419 = vunpack.c.h.b16 %v86
  %v420 = vunpack.c.l.b16 %v87
  %v421 = vunpack.c.h.b16 %v87
  %v422 = vunpack.c.l.b16 %v88
  %v423 = vunpack.c.h.b16 %v88
  %v424 = vunpack.c.l.b16 %v89
  %v425 = vunpack.c.h.b16 %v89
  %v426 = vunpack.c.l.b16 %v90
  %v427 = vunpack.c.h.b16 %v90
  %v428 = vunpack.c.l.b16 %v91
  %v429 = vunpack.c.h.b16 %v91
  %v430 = vunpack.c.l.b16 %v92
  %v431 = vunpack.c.h.b16 %v92
  %v432 = vunpack.c.l.b16 %v93
  %v433 = vunpack.c.h.b16 %v93
  %v434 = vunpack.c.l.b16 %v94
  %v435 = vunpack.c.h.b16 %v94
  %v436 = vunpack.c.l.b16 %v95
  %v437 = vunpack.c.h.b16 %v95
  %v438 = vunpack.c.l.b16 %v96
  %v439 = vunpack.c.h.b16 %v96
  %v440 = vunpack.c.l.b16 %v97
  %v441 = vunpack.c.h.b16 %v97
  %v442 = vunpack.c.l.b16 %v98
  %v443 = vunpack.c.h.b16 %v98
  %v444 = vunpack.c.l.b16 %v99
  %v445 = vunpack.c.h.b16 %v99
  %v446 = vunpack.c.l.b16 %v100
  %v447 = vunpack.c.h.b16 %v100
  %v448 = vunpack.c.l.b16 %v101
  %v449 = vunpack.c.h.b16 %v101
  %v450 = vunpack.c.l.b16 %v102
  %v451 = vunpack.c.h.b16 %v102
  %v452 = vunpack.c.l.b16 %v103
  %v453 = vunpack.c.h.b16 %v103
  %v454 = vunpack.c.l.b16 %v104
  %v455 = vunpack.c.h.b16 %v104
  %v456 = vunpack.c.l.b16 %v105
  %v457 = vunpack.c.h.b16 %v105
  %v458 = vunpack.c.l.b16 %v106
  %v459 = vunpack.c.h.b16 %v106
  %v460 = vunpack.c.l.b16 %v107
  %v461 = vunpack.c.h.b16 %v107
  %v462 = vunpack.c.l.b16 %v108
  %v463 = vunpack.c.h.b16 %v108
  %v464 = vunpack.c.l.b16 %v109
  %v465 = vunpack.c.h.b16 %v109
  %v466 = vunpack.c.l.b16 %v110
  %v467 = vunpack.c.h.b16 %v110
  %v468 = vunpack.c.l.b16 %v111
  %v469 = vunpack.c.h.b16 %v111
  %v470 = vunpack.c.l.b16 %v112
  %v471 = vunpack.c.h.b16 %v112
  %v472 = vunpack.c.l.b16 %v113
  %v473 = vunpack.c.h.b16 %v113
  %v474 = vunpack.c.l.b16 %v114
  %v475 = vunpack.c.h.b16 %v114
  %v476 = vunpack.c.l.b16 %v115
  %v477 = vunpack.c.h.b16 %v115
  %v478 = vunpack.c.l.b16 %v116
  %v479 = vunpack.c.h.b16 %v116
  %v480 = vunpack.c.l.b16 %v117
  %v481 = vunpack.c.h.b16 %v117
  %v482 = vunpack.c.l.b16 %v118
  %v483 = vunpack.c.h.b16 %v118
  %v484 = vunpack.c.l.b16 %v119
  %v485 = vunpack.c.h.b16 %v119
  %v486 = vunpack.c.l.b16 %v120
  %v487 = vunpack.c.h.b16 %v120
  %v488 = vunpack.c.l.b16 %v121
  %v489 = vunpack.c.h.b16 %v121
  %v490 = vpack.c.b16 %v366, %v362
  %v491 = vpack.c.b16 %v367, %v363
  %v492 = vpack.c.b16 %v368, %v364
  %v493 = vpack.c.b16 %v369, %v365
  %v494 = vpack.c.b16 %v374, %v370
  %v495 = vpack.c.b16 %v375, %v371
  %v496 = vpack.c.b16 %v376, %v372
  %v497 = vpack.c.b16 %v377, %v373
  %v498 = vpack.c.b16 %v382, %v378
  %v499 = vpack.c.b16 %v383, %v379
  %v500 = vpack.c.b16 %v384, %v380
  %v501 = vpack.c.b16 %v385, %v381
  %v502 = vpack.c.b16 %v390, %v386
  %v503 = vpack.c.b16 %v391, %v387
  %v504 = vpack.c.b16 %v392, %v388
  %v505 = vpack.c.b16 %v393, %v389
  %v506 = vpack.c.b16 %v398, %v394
  %v507 = vpack.c.b16 %v399, %v395
  %v508 = vpack.c.b16 %v400, %v396
  %v509 = vpack.c.b16 %v401, %v397
  %v510 = vpack.c.b16 %v406, %v402
  %v511 = vpack.c.b16 %v407, %v403
  %v512 = vpack.c.b16 %v408, %v404
  %v513 = vpack.c.b16 %v409, %v405
  %v514 = vpack.c.b16 %v414, %v410
  %v515 = vpack.c.b16 %v415, %v411
  %v516 = vpack.c.b16 %v416, %v412
  %v517 = vpack.c.b16 %v417, %v413
  %v518 = vpack.c.b16 %v422, %v418
  %v519 = vpack.c.b16 %v423, %v419
  %v520 = vpack.c.b16 %v424, %v420
  %v521 = vpack.c.b16 %v425, %v421
  %v522 = vpack.c.b16 %v430, %v426
  %v523 = vpack.c.b16 %v431, %v427
  %v524 = vpack.c.b16 %v432, %v428
  %v525 = vpack.c.b16 %v433, %v429
  %v526 = vpack.c.b16 %v438, %v434
  %v527 = vpack.c.b16 %v439, %v435
  %v528 = vpack.c.b16 %v440, %v436
  %v529 = vpack.c.b16 %v441, %v437
  %v530 = vpack.c.b16 %v446, %v442
  %v531 = vpack.c.b16 %v447, %v443
  %v532 = vpack.c.b16 %v448, %v444
  %v533 = vpack.c.b16 %v449, %v445
  %v534 = vpack.c.b16 %v454, %v450
  %v535 = vpack.c.b16 %v455, %v451
  %v536 = vpack.c.b16 %v456, %v452
  %v537 = vpack.c.b16 %v457, %v453
  %v538 = vpack.c.b16 %v462, %v458
  %v539 = vpack.c.b16 %v463, %v459
  %v540 = vpack.c.b16 %v464, %v460
  %v541 = vpack.c.b16 %v465, %v461
  %v542 = vpack.c.b16 %v470, %v466
  %v543 = vpack.c.b16 %v471, %v467
  %v544 = vpack.c.b16 %v472, %v468
  %v545 = vpack.c.b16 %v473, %v469
  %v546 = vpack.c.b16 %v478, %v474
  %v547 = vpack.c.b16 %v479, %v475
  %v548 = vpack.c.b16 %v480, %v476
  %v549 = vpack.c.b16 %v481, %v477
  %v550 = vpack.c.b16 %v486, %v482
  %v551 = vpack.c.b16 %v487, %v483
  %v552 = vpack.c.b16 %v488, %v484
  %v553 = vpack.c.b16 %v489, %v485
  %618 = vmatprep.subr.bf16.mxu0 %v491
  %619 = vmatpush1.bf16.msra.mxu0 %v490
  %620 = vmatprep.subr.bf16.mxu0 %v495
  %621 = vmatpush1.bf16.msra.mxu0 %v494
  %622 = vmatprep.subr.bf16.mxu0 %v499
  %623 = vmatpush1.bf16.msra.mxu0 %v498
  %624 = vmatprep.subr.bf16.mxu0 %v503
  %625 = vmatpush1.bf16.msra.mxu0 %v502
  %626 = vmatprep.subr.bf16.mxu0 %v507
  %627 = vmatpush1.bf16.msra.mxu0 %v506
  %628 = vmatprep.subr.bf16.mxu0 %v511
  %629 = vmatpush1.bf16.msra.mxu0 %v510
  %630 = vmatprep.subr.bf16.mxu0 %v515
  %631 = vmatpush1.bf16.msra.mxu0 %v514
  %632 = vmatprep.subr.bf16.mxu0 %v519
  %633 = vmatpush1.bf16.msra.mxu0 %v518
  %634 = vmatprep.subr.bf16.mxu0 %v523
  %635 = vmatpush1.bf16.msra.mxu0 %v522
  %636 = vmatprep.subr.bf16.mxu0 %v527
  %637 = vmatpush1.bf16.msra.mxu0 %v526
  %638 = vmatprep.subr.bf16.mxu0 %v531
  %639 = vmatpush1.bf16.msra.mxu0 %v530
  %640 = vmatprep.subr.bf16.mxu0 %v535
  %641 = vmatpush1.bf16.msra.mxu0 %v534
  %642 = vmatprep.subr.bf16.mxu0 %v539
  %643 = vmatpush1.bf16.msra.mxu0 %v538
  %644 = vmatprep.subr.bf16.mxu0 %v543
  %645 = vmatpush1.bf16.msra.mxu0 %v542
  %646 = vmatprep.subr.bf16.mxu0 %v547
  %647 = vmatpush1.bf16.msra.mxu0 %v546
  %648 = vmatprep.subr.bf16.mxu0 %v551
  %649 = vmatpush1.bf16.msra.mxu0 %v550
  %650 = vmatprep.mubr.bf16.mxu0 %v57
  %651 = vmatmul.mubr.bf16.gmra.mrb[0].mxu0 %v56
  %v652 = vpop.f32.mrb[0].mxu0
  %v653 = vadd.f32 %v223, %v652
  %v654 = vpop.f32.mrb[0].mxu0
  %v655 = vadd.f32 %v225, %v654
  %v656 = vpop.f32.mrb[0].mxu0
  %v657 = vpop.f32.mrb[0].mxu0
  %658 = vdwg.mxu0
  %659 = vmatprep.subr.bf16.mxu0 %v493
  %660 = vmatpush1.bf16.msra.mxu0 %v492
  %661 = vmatprep.subr.bf16.mxu0 %v497
  %662 = vmatpush1.bf16.msra.mxu0 %v496
  %663 = vmatprep.subr.bf16.mxu0 %v501
  %664 = vmatpush1.bf16.msra.mxu0 %v500
  %665 = vmatprep.subr.bf16.mxu0 %v505
  %666 = vmatpush1.bf16.msra.mxu0 %v504
  %667 = vmatprep.subr.bf16.mxu0 %v509
  %668 = vmatpush1.bf16.msra.mxu0 %v508
  %669 = vmatprep.subr.bf16.mxu0 %v513
  %670 = vmatpush1.bf16.msra.mxu0 %v512
  %671 = vmatprep.subr.bf16.mxu0 %v517
  %672 = vmatpush1.bf16.msra.mxu0 %v516
  %673 = vmatprep.subr.bf16.mxu0 %v521
  %674 = vmatpush1.bf16.msra.mxu0 %v520
  %675 = vmatprep.subr.bf16.mxu0 %v525
  %676 = vmatpush1.bf16.msra.mxu0 %v524
  %677 = vmatprep.subr.bf16.mxu0 %v529
  %678 = vmatpush1.bf16.msra.mxu0 %v528
  %679 = vmatprep.subr.bf16.mxu0 %v533
  %680 = vmatpush1.bf16.msra.mxu0 %v532
  %681 = vmatprep.subr.bf16.mxu0 %v537
  %682 = vmatpush1.bf16.msra.mxu0 %v536
  %683 = vmatprep.subr.bf16.mxu0 %v541
  %684 = vmatpush1.bf16.msra.mxu0 %v540
  %685 = vmatprep.subr.bf16.mxu0 %v545
  %686 = vmatpush1.bf16.msra.mxu0 %v544
  %687 = vmatprep.subr.bf16.mxu0 %v549
  %688 = vmatpush1.bf16.msra.mxu0 %v548
  %689 = vmatprep.subr.bf16.mxu0 %v553
  %690 = vmatpush1.bf16.msra.mxu0 %v552
  %691 = vmatprep.mubr.bf16.mxu0 %v57
  %692 = vmatmul.mubr.bf16.gmra.mrb[0].mxu0 %v56
  %v693 = vpop.f32.mrb[0].mxu0
  %v694 = vadd.f32 %v294, %v693
  %v695 = vpop.f32.mrb[0].mxu0
  %v696 = vadd.f32 %v296, %v695
  %v697 = vpop.f32.mrb[0].mxu0
  %v698 = vpop.f32.mrb[0].mxu0
  %699 = vdwg.mxu0
  %vm700 = vcmp.gt.f32.partialorder %v653, 0.0
  %vm701 = vcmp.gt.f32.partialorder %v655, 0.0
  %vm702 = vcmp.gt.f32.partialorder %v694, 0.0
  %vm703 = vcmp.gt.f32.partialorder %v696, 0.0
  %v704 = vmul.f32 %v653, 0.2
  %v705 = vmul.f32 %v655, 0.2
  %v706 = vmul.f32 %v694, 0.2
  %v707 = vmul.f32 %v696, 0.2
  %v708 = vsel %vm700, %v653, %v704
  %v709 = vsel %vm701, %v655, %v705
  %v710 = vsel %vm702, %v694, %v706
  %v711 = vsel %vm703, %v696, %v707
  %v712 = vpack.c.bf16 %v708, %v708
  %v713 = vpack.c.bf16 %v709, %v709
  %v714 = vpack.c.bf16 %v710, %v710
  %v715 = vpack.c.bf16 %v711, %v711
  %v716 = vld [vmem:[%s4] sm:$0xff]
  %v717 = vld [vmem:[%s4 + $0x8] sm:$0xff]
  %v718 = vld [vmem:[%s4 + $0x10] sm:$0xff]
  %v719 = vld [vmem:[%s4 + $0x18] sm:$0xff]
  %v720 = vld [vmem:[%s4 + $0x20] sm:$0xff]
  %v721 = vld [vmem:[%s4 + $0x28] sm:$0xff]
  %v722 = vld [vmem:[%s4 + $0x30] sm:$0xff]
  %v723 = vld [vmem:[%s4 + $0x38] sm:$0xff]
  %v724 = vld [vmem:[%s4 + $0x40] sm:$0xff]
  %v725 = vld [vmem:[%s4 + $0x48] sm:$0xff]
  %v726 = vld [vmem:[%s4 + $0x50] sm:$0xff]
  %v727 = vld [vmem:[%s4 + $0x58] sm:$0xff]
  %v728 = vld [vmem:[%s4 + $0x60] sm:$0xff]
  %v729 = vld [vmem:[%s4 + $0x68] sm:$0xff]
  %v730 = vld [vmem:[%s4 + $0x70] sm:$0xff]
  %v731 = vld [vmem:[%s4 + $0x78] sm:$0xff]
  %v732 = vld [vmem:[%s4 + $0x80] sm:$0xff]
  %v733 = vld [vmem:[%s4 + $0x88] sm:$0xff]
  %v734 = vld [vmem:[%s4 + $0x90] sm:$0xff]
  %v735 = vld [vmem:[%s4 + $0x98] sm:$0xff]
  %v736 = vld [vmem:[%s4 + $0xa0] sm:$0xff]
  %v737 = vld [vmem:[%s4 + $0xa8] sm:$0xff]
  %v738 = vld [vmem:[%s4 + $0xb0] sm:$0xff]
  %v739 = vld [vmem:[%s4 + $0xb8] sm:$0xff]
  %v740 = vld [vmem:[%s4 + $0xc0] sm:$0xff]
  %v741 = vld [vmem:[%s4 + $0xc8] sm:$0xff]
  %v742 = vld [vmem:[%s4 + $0xd0] sm:$0xff]
  %v743 = vld [vmem:[%s4 + $0xd8] sm:$0xff]
  %v744 = vld [vmem:[%s4 + $0xe0] sm:$0xff]
  %v745 = vld [vmem:[%s4 + $0xe8] sm:$0xff]
  %v746 = vld [vmem:[%s4 + $0xf0] sm:$0xff]
  %v747 = vld [vmem:[%s4 + $0xf8] sm:$0xff]
  %v748 = vld [vmem:[%s4 + $0x100] sm:$0xff]
  %v749 = vld [vmem:[%s4 + $0x108] sm:$0xff]
  %v750 = vld [vmem:[%s4 + $0x110] sm:$0xff]
  %v751 = vld [vmem:[%s4 + $0x118] sm:$0xff]
  %v752 = vld [vmem:[%s4 + $0x120] sm:$0xff]
  %v753 = vld [vmem:[%s4 + $0x128] sm:$0xff]
  %v754 = vld [vmem:[%s4 + $0x130] sm:$0xff]
  %v755 = vld [vmem:[%s4 + $0x138] sm:$0xff]
  %v756 = vld [vmem:[%s4 + $0x140] sm:$0xff]
  %v757 = vld [vmem:[%s4 + $0x148] sm:$0xff]
  %v758 = vld [vmem:[%s4 + $0x150] sm:$0xff]
  %v759 = vld [vmem:[%s4 + $0x158] sm:$0xff]
  %v760 = vld [vmem:[%s4 + $0x160] sm:$0xff]
  %v761 = vld [vmem:[%s4 + $0x168] sm:$0xff]
  %v762 = vld [vmem:[%s4 + $0x170] sm:$0xff]
  %v763 = vld [vmem:[%s4 + $0x178] sm:$0xff]
  %v764 = vld [vmem:[%s4 + $0x180] sm:$0xff]
  %v765 = vld [vmem:[%s4 + $0x188] sm:$0xff]
  %v766 = vld [vmem:[%s4 + $0x190] sm:$0xff]
  %v767 = vld [vmem:[%s4 + $0x198] sm:$0xff]
  %v768 = vld [vmem:[%s4 + $0x1a0] sm:$0xff]
  %v769 = vld [vmem:[%s4 + $0x1a8] sm:$0xff]
  %v770 = vld [vmem:[%s4 + $0x1b0] sm:$0xff]
  %v771 = vld [vmem:[%s4 + $0x1b8] sm:$0xff]
  %v772 = vld [vmem:[%s4 + $0x1c0] sm:$0xff]
  %v773 = vld [vmem:[%s4 + $0x1c8] sm:$0xff]
  %v774 = vld [vmem:[%s4 + $0x1d0] sm:$0xff]
  %v775 = vld [vmem:[%s4 + $0x1d8] sm:$0xff]
  %v776 = vld [vmem:[%s4 + $0x1e0] sm:$0xff]
  %v777 = vld [vmem:[%s4 + $0x1e8] sm:$0xff]
  %v778 = vld [vmem:[%s4 + $0x1f0] sm:$0xff]
  %v779 = vld [vmem:[%s4 + $0x1f8] sm:$0xff]
  %v780 = vld [vmem:[%s5] sm:$0x3]
  %v782 = vlaneseq
  %v783 = vshrl.u32 %v782, 7
  %v784 = vsub.s32 0, %v783
  %v785 = vrot.slane %v780, %v784
  %v786 = vlaneseq
  %v787 = vshrl.u32 %v786, 7
  %v788 = vsub.s32 1, %v787
  %v789 = vrot.slane %v780, %v788
  %v856 = vunpack.c.l.b16 %v716
  %v857 = vunpack.c.h.b16 %v716
  %v858 = vunpack.c.l.b16 %v717
  %v859 = vunpack.c.h.b16 %v717
  %v860 = vunpack.c.l.b16 %v718
  %v861 = vunpack.c.h.b16 %v718
  %v862 = vunpack.c.l.b16 %v719
  %v863 = vunpack.c.h.b16 %v719
  %v864 = vunpack.c.l.b16 %v720
  %v865 = vunpack.c.h.b16 %v720
  %v866 = vunpack.c.l.b16 %v721
  %v867 = vunpack.c.h.b16 %v721
  %v868 = vunpack.c.l.b16 %v722
  %v869 = vunpack.c.h.b16 %v722
  %v870 = vunpack.c.l.b16 %v723
  %v871 = vunpack.c.h.b16 %v723
  %v872 = vunpack.c.l.b16 %v724
  %v873 = vunpack.c.h.b16 %v724
  %v874 = vunpack.c.l.b16 %v725
  %v875 = vunpack.c.h.b16 %v725
  %v876 = vunpack.c.l.b16 %v726
  %v877 = vunpack.c.h.b16 %v726
  %v878 = vunpack.c.l.b16 %v727
  %v879 = vunpack.c.h.b16 %v727
  %v880 = vunpack.c.l.b16 %v728
  %v881 = vunpack.c.h.b16 %v728
  %v882 = vunpack.c.l.b16 %v729
  %v883 = vunpack.c.h.b16 %v729
  %v884 = vunpack.c.l.b16 %v730
  %v885 = vunpack.c.h.b16 %v730
  %v886 = vunpack.c.l.b16 %v731
  %v887 = vunpack.c.h.b16 %v731
  %v888 = vunpack.c.l.b16 %v732
  %v889 = vunpack.c.h.b16 %v732
  %v890 = vunpack.c.l.b16 %v733
  %v891 = vunpack.c.h.b16 %v733
  %v892 = vunpack.c.l.b16 %v734
  %v893 = vunpack.c.h.b16 %v734
  %v894 = vunpack.c.l.b16 %v735
  %v895 = vunpack.c.h.b16 %v735
  %v896 = vunpack.c.l.b16 %v736
  %v897 = vunpack.c.h.b16 %v736
  %v898 = vunpack.c.l.b16 %v737
  %v899 = vunpack.c.h.b16 %v737
  %v900 = vunpack.c.l.b16 %v738
  %v901 = vunpack.c.h.b16 %v738
  %v902 = vunpack.c.l.b16 %v739
  %v903 = vunpack.c.h.b16 %v739
  %v904 = vunpack.c.l.b16 %v740
  %v905 = vunpack.c.h.b16 %v740
  %v906 = vunpack.c.l.b16 %v741
  %v907 = vunpack.c.h.b16 %v741
  %v908 = vunpack.c.l.b16 %v742
  %v909 = vunpack.c.h.b16 %v742
  %v910 = vunpack.c.l.b16 %v743
  %v911 = vunpack.c.h.b16 %v743
  %v912 = vunpack.c.l.b16 %v744
  %v913 = vunpack.c.h.b16 %v744
  %v914 = vunpack.c.l.b16 %v745
  %v915 = vunpack.c.h.b16 %v745
  %v916 = vunpack.c.l.b16 %v746
  %v917 = vunpack.c.h.b16 %v746
  %v918 = vunpack.c.l.b16 %v747
  %v919 = vunpack.c.h.b16 %v747
  %v920 = vunpack.c.l.b16 %v748
  %v921 = vunpack.c.h.b16 %v748
  %v922 = vunpack.c.l.b16 %v749
  %v923 = vunpack.c.h.b16 %v749
  %v924 = vunpack.c.l.b16 %v750
  %v925 = vunpack.c.h.b16 %v750
  %v926 = vunpack.c.l.b16 %v751
  %v927 = vunpack.c.h.b16 %v751
  %v928 = vunpack.c.l.b16 %v752
  %v929 = vunpack.c.h.b16 %v752
  %v930 = vunpack.c.l.b16 %v753
  %v931 = vunpack.c.h.b16 %v753
  %v932 = vunpack.c.l.b16 %v754
  %v933 = vunpack.c.h.b16 %v754
  %v934 = vunpack.c.l.b16 %v755
  %v935 = vunpack.c.h.b16 %v755
  %v936 = vunpack.c.l.b16 %v756
  %v937 = vunpack.c.h.b16 %v756
  %v938 = vunpack.c.l.b16 %v757
  %v939 = vunpack.c.h.b16 %v757
  %v940 = vunpack.c.l.b16 %v758
  %v941 = vunpack.c.h.b16 %v758
  %v942 = vunpack.c.l.b16 %v759
  %v943 = vunpack.c.h.b16 %v759
  %v944 = vunpack.c.l.b16 %v760
  %v945 = vunpack.c.h.b16 %v760
  %v946 = vunpack.c.l.b16 %v761
  %v947 = vunpack.c.h.b16 %v761
  %v948 = vunpack.c.l.b16 %v762
  %v949 = vunpack.c.h.b16 %v762
  %v950 = vunpack.c.l.b16 %v763
  %v951 = vunpack.c.h.b16 %v763
  %v952 = vunpack.c.l.b16 %v764
  %v953 = vunpack.c.h.b16 %v764
  %v954 = vunpack.c.l.b16 %v765
  %v955 = vunpack.c.h.b16 %v765
  %v956 = vunpack.c.l.b16 %v766
  %v957 = vunpack.c.h.b16 %v766
  %v958 = vunpack.c.l.b16 %v767
  %v959 = vunpack.c.h.b16 %v767
  %v960 = vunpack.c.l.b16 %v768
  %v961 = vunpack.c.h.b16 %v768
  %v962 = vunpack.c.l.b16 %v769
  %v963 = vunpack.c.h.b16 %v769
  %v964 = vunpack.c.l.b16 %v770
  %v965 = vunpack.c.h.b16 %v770
  %v966 = vunpack.c.l.b16 %v771
  %v967 = vunpack.c.h.b16 %v771
  %v968 = vunpack.c.l.b16 %v772
  %v969 = vunpack.c.h.b16 %v772
  %v970 = vunpack.c.l.b16 %v773
  %v971 = vunpack.c.h.b16 %v773
  %v972 = vunpack.c.l.b16 %v774
  %v973 = vunpack.c.h.b16 %v774
  %v974 = vunpack.c.l.b16 %v775
  %v975 = vunpack.c.h.b16 %v775
  %v976 = vunpack.c.l.b16 %v776
  %v977 = vunpack.c.h.b16 %v776
  %v978 = vunpack.c.l.b16 %v777
  %v979 = vunpack.c.h.b16 %v777
  %v980 = vunpack.c.l.b16 %v778
  %v981 = vunpack.c.h.b16 %v778
  %v982 = vunpack.c.l.b16 %v779
  %v983 = vunpack.c.h.b16 %v779
  %v984 = vpack.c.b16 %v858, %v856
  %v985 = vpack.c.b16 %v859, %v857
  %v986 = vpack.c.b16 %v862, %v860
  %v987 = vpack.c.b16 %v863, %v861
  %v988 = vpack.c.b16 %v866, %v864
  %v989 = vpack.c.b16 %v867, %v865
  %v990 = vpack.c.b16 %v870, %v868
  %v991 = vpack.c.b16 %v871, %v869
  %v992 = vpack.c.b16 %v874, %v872
  %v993 = vpack.c.b16 %v875, %v873
  %v994 = vpack.c.b16 %v878, %v876
  %v995 = vpack.c.b16 %v879, %v877
  %v996 = vpack.c.b16 %v882, %v880
  %v997 = vpack.c.b16 %v883, %v881
  %v998 = vpack.c.b16 %v886, %v884
  %v999 = vpack.c.b16 %v887, %v885
  %v1000 = vpack.c.b16 %v890, %v888
  %v1001 = vpack.c.b16 %v891, %v889
  %v1002 = vpack.c.b16 %v894, %v892
  %v1003 = vpack.c.b16 %v895, %v893
  %v1004 = vpack.c.b16 %v898, %v896
  %v1005 = vpack.c.b16 %v899, %v897
  %v1006 = vpack.c.b16 %v902, %v900
  %v1007 = vpack.c.b16 %v903, %v901
  %v1008 = vpack.c.b16 %v906, %v904
  %v1009 = vpack.c.b16 %v907, %v905
  %v1010 = vpack.c.b16 %v910, %v908
  %v1011 = vpack.c.b16 %v911, %v909
  %v1012 = vpack.c.b16 %v914, %v912
  %v1013 = vpack.c.b16 %v915, %v913
  %v1014 = vpack.c.b16 %v918, %v916
  %v1015 = vpack.c.b16 %v919, %v917
  %v1016 = vpack.c.b16 %v922, %v920
  %v1017 = vpack.c.b16 %v923, %v921
  %v1018 = vpack.c.b16 %v926, %v924
  %v1019 = vpack.c.b16 %v927, %v925
  %v1020 = vpack.c.b16 %v930, %v928
  %v1021 = vpack.c.b16 %v931, %v929
  %v1022 = vpack.c.b16 %v934, %v932
  %v1023 = vpack.c.b16 %v935, %v933
  %v1024 = vpack.c.b16 %v938, %v936
  %v1025 = vpack.c.b16 %v939, %v937
  %v1026 = vpack.c.b16 %v942, %v940
  %v1027 = vpack.c.b16 %v943, %v941
  %v1028 = vpack.c.b16 %v946, %v944
  %v1029 = vpack.c.b16 %v947, %v945
  %v1030 = vpack.c.b16 %v950, %v948
  %v1031 = vpack.c.b16 %v951, %v949
  %v1032 = vpack.c.b16 %v954, %v952
  %v1033 = vpack.c.b16 %v955, %v953
  %v1034 = vpack.c.b16 %v958, %v956
  %v1035 = vpack.c.b16 %v959, %v957
  %v1036 = vpack.c.b16 %v962, %v960
  %v1037 = vpack.c.b16 %v963, %v961
  %v1038 = vpack.c.b16 %v966, %v964
  %v1039 = vpack.c.b16 %v967, %v965
  %v1040 = vpack.c.b16 %v970, %v968
  %v1041 = vpack.c.b16 %v971, %v969
  %v1042 = vpack.c.b16 %v974, %v972
  %v1043 = vpack.c.b16 %v975, %v973
  %v1044 = vpack.c.b16 %v978, %v976
  %v1045 = vpack.c.b16 %v979, %v977
  %v1046 = vpack.c.b16 %v982, %v980
  %v1047 = vpack.c.b16 %v983, %v981
  %1112 = vmatprep.subr.bf16.mxu0 %v985
  %1113 = vmatpush1.bf16.msra.mxu0 %v984
  %1114 = vmatprep.subr.bf16.mxu0 %v987
  %1115 = vmatpush1.bf16.msra.mxu0 %v986
  %1116 = vmatprep.subr.bf16.mxu0 %v989
  %1117 = vmatpush1.bf16.msra.mxu0 %v988
  %1118 = vmatprep.subr.bf16.mxu0 %v991
  %1119 = vmatpush1.bf16.msra.mxu0 %v990
  %1120 = vmatprep.subr.bf16.mxu0 %v993
  %1121 = vmatpush1.bf16.msra.mxu0 %v992
  %1122 = vmatprep.subr.bf16.mxu0 %v995
  %1123 = vmatpush1.bf16.msra.mxu0 %v994
  %1124 = vmatprep.subr.bf16.mxu0 %v997
  %1125 = vmatpush1.bf16.msra.mxu0 %v996
  %1126 = vmatprep.subr.bf16.mxu0 %v999
  %1127 = vmatpush1.bf16.msra.mxu0 %v998
  %1128 = vmatprep.subr.bf16.mxu0 %v1001
  %1129 = vmatpush1.bf16.msra.mxu0 %v1000
  %1130 = vmatprep.subr.bf16.mxu0 %v1003
  %1131 = vmatpush1.bf16.msra.mxu0 %v1002
  %1132 = vmatprep.subr.bf16.mxu0 %v1005
  %1133 = vmatpush1.bf16.msra.mxu0 %v1004
  %1134 = vmatprep.subr.bf16.mxu0 %v1007
  %1135 = vmatpush1.bf16.msra.mxu0 %v1006
  %1136 = vmatprep.subr.bf16.mxu0 %v1009
  %1137 = vmatpush1.bf16.msra.mxu0 %v1008
  %1138 = vmatprep.subr.bf16.mxu0 %v1011
  %1139 = vmatpush1.bf16.msra.mxu0 %v1010
  %1140 = vmatprep.subr.bf16.mxu0 %v1013
  %1141 = vmatpush1.bf16.msra.mxu0 %v1012
  %1142 = vmatprep.subr.bf16.mxu0 %v1015
  %1143 = vmatpush1.bf16.msra.mxu0 %v1014
  %1144 = vmatprep.mubr.bf16.mxu0 %v713
  %1145 = vmatmul.mubr.bf16.gmra.mrb[0].mxu0 %v712
  %v1146 = vpop.f32.mrb[0].mxu0
  %v1147 = vadd.f32 %v785, %v1146
  %v1148 = vpop.f32.mrb[0].mxu0
  %v1149 = vadd.f32 %v789, %v1148
  %v1150 = vpop.f32.mrb[0].mxu0
  %v1151 = vpop.f32.mrb[0].mxu0
  %1152 = vdwg.mxu0
  %1153 = vmatprep.subr.bf16.mxu0 %v1017
  %1154 = vmatpush1.bf16.msra.mxu0 %v1016
  %1155 = vmatprep.subr.bf16.mxu0 %v1019
  %1156 = vmatpush1.bf16.msra.mxu0 %v1018
  %1157 = vmatprep.subr.bf16.mxu0 %v1021
  %1158 = vmatpush1.bf16.msra.mxu0 %v1020
  %1159 = vmatprep.subr.bf16.mxu0 %v1023
  %1160 = vmatpush1.bf16.msra.mxu0 %v1022
  %1161 = vmatprep.subr.bf16.mxu0 %v1025
  %1162 = vmatpush1.bf16.msra.mxu0 %v1024
  %1163 = vmatprep.subr.bf16.mxu0 %v1027
  %1164 = vmatpush1.bf16.msra.mxu0 %v1026
  %1165 = vmatprep.subr.bf16.mxu0 %v1029
  %1166 = vmatpush1.bf16.msra.mxu0 %v1028
  %1167 = vmatprep.subr.bf16.mxu0 %v1031
  %1168 = vmatpush1.bf16.msra.mxu0 %v1030
  %1169 = vmatprep.subr.bf16.mxu0 %v1033
  %1170 = vmatpush1.bf16.msra.mxu0 %v1032
  %1171 = vmatprep.subr.bf16.mxu0 %v1035
  %1172 = vmatpush1.bf16.msra.mxu0 %v1034
  %1173 = vmatprep.subr.bf16.mxu0 %v1037
  %1174 = vmatpush1.bf16.msra.mxu0 %v1036
  %1175 = vmatprep.subr.bf16.mxu0 %v1039
  %1176 = vmatpush1.bf16.msra.mxu0 %v1038
  %1177 = vmatprep.subr.bf16.mxu0 %v1041
  %1178 = vmatpush1.bf16.msra.mxu0 %v1040
  %1179 = vmatprep.subr.bf16.mxu0 %v1043
  %1180 = vmatpush1.bf16.msra.mxu0 %v1042
  %1181 = vmatprep.subr.bf16.mxu0 %v1045
  %1182 = vmatpush1.bf16.msra.mxu0 %v1044
  %1183 = vmatprep.subr.bf16.mxu0 %v1047
  %1184 = vmatpush1.bf16.msra.mxu0 %v1046
  %1185 = vmatprep.mubr.bf16.mxu0 %v715
  %1186 = vmatmul.mubr.bf16.gmra.mrb[0].mxu0 %v714
  %v1187 = vpop.f32.mrb[0].mxu0
  %v1188 = vadd.f32 %v1147, %v1187
  %v1189 = vpop.f32.mrb[0].mxu0
  %v1190 = vadd.f32 %v1149, %v1189
  %v1191 = vpop.f32.mrb[0].mxu0
  %v1192 = vpop.f32.mrb[0].mxu0
  %1193 = vdwg.mxu0
  %vm1194 = vcmp.gt.f32.partialorder %v1188, 0.0
  %vm1195 = vcmp.gt.f32.partialorder %v1190, 0.0
  %v1196 = vmul.f32 %v1188, 0.2
  %v1197 = vmul.f32 %v1190, 0.2
  %v1198 = vsel %vm1194, %v1188, %v1196
  %v1199 = vsel %vm1195, %v1190, %v1197
  %v1200 = vpack.c.bf16 %v1198, %v1198
  %v1201 = vpack.c.bf16 %v1199, %v1199
  %v1202 = vld [vmem:[%s6] sm:$0xf]
  %v1203 = vld [vmem:[%s6 + $0x4] sm:$0xf]
  %v1204 = vld [vmem:[%s6 + $0x8] sm:$0xf]
  %v1205 = vld [vmem:[%s6 + $0xc] sm:$0xf]
  %v1206 = vld [vmem:[%s6 + $0x10] sm:$0xf]
  %v1207 = vld [vmem:[%s6 + $0x14] sm:$0xf]
  %v1208 = vld [vmem:[%s6 + $0x18] sm:$0xf]
  %v1209 = vld [vmem:[%s6 + $0x1c] sm:$0xf]
  %v1210 = vld [vmem:[%s6 + $0x20] sm:$0xf]
  %v1211 = vld [vmem:[%s6 + $0x24] sm:$0xf]
  %v1212 = vld [vmem:[%s6 + $0x28] sm:$0xf]
  %v1213 = vld [vmem:[%s6 + $0x2c] sm:$0xf]
  %v1214 = vld [vmem:[%s6 + $0x30] sm:$0xf]
  %v1215 = vld [vmem:[%s6 + $0x34] sm:$0xf]
  %v1216 = vld [vmem:[%s6 + $0x38] sm:$0xf]
  %v1217 = vld [vmem:[%s6 + $0x3c] sm:$0xf]
  %v1218 = vld [vmem:[%s6 + $0x40] sm:$0xf]
  %v1219 = vld [vmem:[%s6 + $0x44] sm:$0xf]
  %v1220 = vld [vmem:[%s6 + $0x48] sm:$0xf]
  %v1221 = vld [vmem:[%s6 + $0x4c] sm:$0xf]
  %v1222 = vld [vmem:[%s6 + $0x50] sm:$0xf]
  %v1223 = vld [vmem:[%s6 + $0x54] sm:$0xf]
  %v1224 = vld [vmem:[%s6 + $0x58] sm:$0xf]
  %v1225 = vld [vmem:[%s6 + $0x5c] sm:$0xf]
  %v1226 = vld [vmem:[%s6 + $0x60] sm:$0xf]
  %v1227 = vld [vmem:[%s6 + $0x64] sm:$0xf]
  %v1228 = vld [vmem:[%s6 + $0x68] sm:$0xf]
  %v1229 = vld [vmem:[%s6 + $0x6c] sm:$0xf]
  %v1230 = vld [vmem:[%s6 + $0x70] sm:$0xf]
  %v1231 = vld [vmem:[%s6 + $0x74] sm:$0xf]
  %v1232 = vld [vmem:[%s6 + $0x78] sm:$0xf]
  %v1233 = vld [vmem:[%s6 + $0x7c] sm:$0xf]
  %v1234 = vld [vmem:[%s7] sm:$0x1]
  %v1236 = vlaneseq
  %v1237 = vshrl.u32 %v1236, 7
  %v1238 = vsub.s32 0, %v1237
  %v1239 = vrot.slane %v1234, %v1238
  %v1273 = vunpack.c.l.b16 %v1202
  %v1274 = vunpack.c.l.b16 %v1203
  %v1275 = vunpack.c.l.b16 %v1204
  %v1276 = vunpack.c.l.b16 %v1205
  %v1277 = vunpack.c.l.b16 %v1206
  %v1278 = vunpack.c.l.b16 %v1207
  %v1279 = vunpack.c.l.b16 %v1208
  %v1280 = vunpack.c.l.b16 %v1209
  %v1281 = vunpack.c.l.b16 %v1210
  %v1282 = vunpack.c.l.b16 %v1211
  %v1283 = vunpack.c.l.b16 %v1212
  %v1284 = vunpack.c.l.b16 %v1213
  %v1285 = vunpack.c.l.b16 %v1214
  %v1286 = vunpack.c.l.b16 %v1215
  %v1287 = vunpack.c.l.b16 %v1216
  %v1288 = vunpack.c.l.b16 %v1217
  %v1289 = vunpack.c.l.b16 %v1218
  %v1290 = vunpack.c.l.b16 %v1219
  %v1291 = vunpack.c.l.b16 %v1220
  %v1292 = vunpack.c.l.b16 %v1221
  %v1293 = vunpack.c.l.b16 %v1222
  %v1294 = vunpack.c.l.b16 %v1223
  %v1295 = vunpack.c.l.b16 %v1224
  %v1296 = vunpack.c.l.b16 %v1225
  %v1297 = vunpack.c.l.b16 %v1226
  %v1298 = vunpack.c.l.b16 %v1227
  %v1299 = vunpack.c.l.b16 %v1228
  %v1300 = vunpack.c.l.b16 %v1229
  %v1301 = vunpack.c.l.b16 %v1230
  %v1302 = vunpack.c.l.b16 %v1231
  %v1303 = vunpack.c.l.b16 %v1232
  %v1304 = vunpack.c.l.b16 %v1233
  %v1305 = vpack.c.b16 %v1274, %v1273
  %v1306 = vpack.c.b16 %v1276, %v1275
  %v1307 = vpack.c.b16 %v1278, %v1277
  %v1308 = vpack.c.b16 %v1280, %v1279
  %v1309 = vpack.c.b16 %v1282, %v1281
  %v1310 = vpack.c.b16 %v1284, %v1283
  %v1311 = vpack.c.b16 %v1286, %v1285
  %v1312 = vpack.c.b16 %v1288, %v1287
  %v1313 = vpack.c.b16 %v1290, %v1289
  %v1314 = vpack.c.b16 %v1292, %v1291
  %v1315 = vpack.c.b16 %v1294, %v1293
  %v1316 = vpack.c.b16 %v1296, %v1295
  %v1317 = vpack.c.b16 %v1298, %v1297
  %v1318 = vpack.c.b16 %v1300, %v1299
  %v1319 = vpack.c.b16 %v1302, %v1301
  %v1320 = vpack.c.b16 %v1304, %v1303
  %1337 = vmatprep.subr.bf16.mxu0 0
  %1338 = vmatpush1.bf16.msra.mxu0 %v1305
  %1339 = vmatprep.subr.bf16.mxu0 0
  %1340 = vmatpush1.bf16.msra.mxu0 %v1306
  %1341 = vmatprep.subr.bf16.mxu0 0
  %1342 = vmatpush1.bf16.msra.mxu0 %v1307
  %1343 = vmatprep.subr.bf16.mxu0 0
  %1344 = vmatpush1.bf16.msra.mxu0 %v1308
  %1345 = vmatprep.subr.bf16.mxu0 0
  %1346 = vmatpush1.bf16.msra.mxu0 %v1309
  %1347 = vmatprep.subr.bf16.mxu0 0
  %1348 = vmatpush1.bf16.msra.mxu0 %v1310
  %1349 = vmatprep.subr.bf16.mxu0 0
  %1350 = vmatpush1.bf16.msra.mxu0 %v1311
  %1351 = vmatprep.subr.bf16.mxu0 0
  %1352 = vmatpush1.bf16.msra.mxu0 %v1312
  %1353 = vmatprep.subr.bf16.mxu0 0
  %1354 = vmatpush1.bf16.msra.mxu0 %v1313
  %1355 = vmatprep.subr.bf16.mxu0 0
  %1356 = vmatpush1.bf16.msra.mxu0 %v1314
  %1357 = vmatprep.subr.bf16.mxu0 0
  %1358 = vmatpush1.bf16.msra.mxu0 %v1315
  %1359 = vmatprep.subr.bf16.mxu0 0
  %1360 = vmatpush1.bf16.msra.mxu0 %v1316
  %1361 = vmatprep.subr.bf16.mxu0 0
  %1362 = vmatpush1.bf16.msra.mxu0 %v1317
  %1363 = vmatprep.subr.bf16.mxu0 0
  %1364 = vmatpush1.bf16.msra.mxu0 %v1318
  %1365 = vmatprep.subr.bf16.mxu0 0
  %1366 = vmatpush1.bf16.msra.mxu0 %v1319
  %1367 = vmatprep.subr.bf16.mxu0 0
  %1368 = vmatpush1.bf16.msra.mxu0 %v1320
  %1369 = vmatprep.mubr.bf16.mxu0 %v1201
  %1370 = vmatmul.mubr.bf16.gmra.mrb[0].mxu0 %v1200
  %v1371 = vpop.f32.mrb[0].mxu0
  %v1372 = vadd.f32 %v1239, %v1371
  %v1373 = vpop.f32.mrb[0].mxu0
  %v1374 = vpop.f32.mrb[0].mxu0
  %v1375 = vpop.f32.mrb[0].mxu0
  %1376 = vdwg.mxu0
  %vm1377 = vcmp.gt.f32.partialorder %v1372, 0.0
  %v1378 = vmul.f32 %v1372, 0.2
  %v1379 = vsel %vm1377, %v1372, %v1378
  %v1380 = vpack.c.bf16 %v1379, %v1379
  %v1381 = vld [vmem:[%s8] sm:$0xf]
  %v1382 = vld [vmem:[%s8 + $0x4] sm:$0xf]
  %v1383 = vld [vmem:[%s8 + $0x8] sm:$0xf]
  %v1384 = vld [vmem:[%s8 + $0xc] sm:$0xf]
  %v1385 = vld [vmem:[%s8 + $0x10] sm:$0xf]
  %v1386 = vld [vmem:[%s8 + $0x14] sm:$0xf]
  %v1387 = vld [vmem:[%s8 + $0x18] sm:$0xf]
  %v1388 = vld [vmem:[%s8 + $0x1c] sm:$0xf]
  %v1389 = vld [vmem:[%s8 + $0x20] sm:$0xf]
  %v1390 = vld [vmem:[%s8 + $0x24] sm:$0xf]
  %v1391 = vld [vmem:[%s8 + $0x28] sm:$0xf]
  %v1392 = vld [vmem:[%s8 + $0x2c] sm:$0xf]
  %v1393 = vld [vmem:[%s8 + $0x30] sm:$0xf]
  %v1394 = vld [vmem:[%s8 + $0x34] sm:$0xf]
  %v1395 = vld [vmem:[%s8 + $0x38] sm:$0xf]
  %v1396 = vld [vmem:[%s8 + $0x3c] sm:$0xf]
  %v1397 = vld [vmem:[%s9] sm:$0x1]
  %v1399 = vlaneseq
  %v1400 = vshrl.u32 %v1399, 7
  %v1401 = vsub.s32 0, %v1400
  %v1402 = vrot.slane %v1397, %v1401
  %v1420 = vunpack.c.l.b16 %v1381
  %v1421 = vunpack.c.l.b16 %v1382
  %v1422 = vunpack.c.l.b16 %v1383
  %v1423 = vunpack.c.l.b16 %v1384
  %v1424 = vunpack.c.l.b16 %v1385
  %v1425 = vunpack.c.l.b16 %v1386
  %v1426 = vunpack.c.l.b16 %v1387
  %v1427 = vunpack.c.l.b16 %v1388
  %v1428 = vunpack.c.l.b16 %v1389
  %v1429 = vunpack.c.l.b16 %v1390
  %v1430 = vunpack.c.l.b16 %v1391
  %v1431 = vunpack.c.l.b16 %v1392
  %v1432 = vunpack.c.l.b16 %v1393
  %v1433 = vunpack.c.l.b16 %v1394
  %v1434 = vunpack.c.l.b16 %v1395
  %v1435 = vunpack.c.l.b16 %v1396
  %v1436 = vpack.c.b16 %v1421, %v1420
  %v1437 = vpack.c.b16 %v1423, %v1422
  %v1438 = vpack.c.b16 %v1425, %v1424
  %v1439 = vpack.c.b16 %v1427, %v1426
  %v1440 = vpack.c.b16 %v1429, %v1428
  %v1441 = vpack.c.b16 %v1431, %v1430
  %v1442 = vpack.c.b16 %v1433, %v1432
  %v1443 = vpack.c.b16 %v1435, %v1434
  %1452 = vmatprep.subr.bf16.mxu0 0
  %1453 = vmatpush1.bf16.msra.mxu0 %v1436
  %1454 = vmatprep.subr.bf16.mxu0 0
  %1455 = vmatpush1.bf16.msra.mxu0 %v1437
  %1456 = vmatprep.subr.bf16.mxu0 0
  %1457 = vmatpush1.bf16.msra.mxu0 %v1438
  %1458 = vmatprep.subr.bf16.mxu0 0
  %1459 = vmatpush1.bf16.msra.mxu0 %v1439
  %1460 = vmatprep.subr.bf16.mxu0 0
  %1461 = vmatpush1.bf16.msra.mxu0 %v1440
  %1462 = vmatprep.subr.bf16.mxu0 0
  %1463 = vmatpush1.bf16.msra.mxu0 %v1441
  %1464 = vmatprep.subr.bf16.mxu0 0
  %1465 = vmatpush1.bf16.msra.mxu0 %v1442
  %1466 = vmatprep.subr.bf16.mxu0 0
  %1467 = vmatpush1.bf16.msra.mxu0 %v1443
  %1468 = vmatprep.subr.bf16.mxu0 0
  %1469 = vmatpush1.bf16.msra.mxu0 0
  %1470 = vmatprep.subr.bf16.mxu0 0
  %1471 = vmatpush1.bf16.msra.mxu0 0
  %1472 = vmatprep.subr.bf16.mxu0 0
  %1473 = vmatpush1.bf16.msra.mxu0 0
  %1474 = vmatprep.subr.bf16.mxu0 0
  %1475 = vmatpush1.bf16.msra.mxu0 0
  %1476 = vmatprep.subr.bf16.mxu0 0
  %1477 = vmatpush1.bf16.msra.mxu0 0
  %1478 = vmatprep.subr.bf16.mxu0 0
  %1479 = vmatpush1.bf16.msra.mxu0 0
  %1480 = vmatprep.subr.bf16.mxu0 0
  %1481 = vmatpush1.bf16.msra.mxu0 0
  %1482 = vmatprep.subr.bf16.mxu0 0
  %1483 = vmatpush1.bf16.msra.mxu0 0
  %1484 = vmatprep.mubr.bf16.mxu0 0
  %1485 = vmatmul.mubr.bf16.gmra.mrb[0].mxu0 %v1380
  %v1486 = vpop.f32.mrb[0].mxu0
  %v1487 = vadd.f32 %v1402, %v1486
  %v1488 = vpop.f32.mrb[0].mxu0
  %v1489 = vpop.f32.mrb[0].mxu0
  %v1490 = vpop.f32.mrb[0].mxu0
  %1491 = vdwg.mxu0
  %vm1492 = vcmp.gt.f32.partialorder %v1487, 0.0
  %v1493 = vmul.f32 %v1487, 0.2
  %v1494 = vsel %vm1492, %v1487, %v1493
  %v1495 = vpack.c.bf16 %v1494, %v1494
  %v1496 = vunpack.c.l.bf16 %v1495
  %v1497 = vld [vmem:[%s10] sm:$0x1]
  %v1498 = vunpack.c.l.bf16 %v1497
  %v1499 = vlaneseq
  %v1500 = vshrl.u32 %v1499, 7
  %v1501 = vsub.s32 0, %v1500
  %v1502 = vrot.slane %v1498, %v1501
  %v1503 = vmul.f32 %v1496, %v1502
  %vm1504 = vcmask 517120
  %v1505 = vsel %vm1504, %v1503, 0.0
  %1506 = vadd.xlane.f32.xlu0 %v1505
  %v1507 = vpop.xlane.xlu0 %1506
  %v1508 = vld [vmem:[#allocation2] sm:$0x1]
  %v1510 = vlaneseq
  %v1511 = vshrl.u32 %v1510, 7
  %v1512 = vsub.s32 0, %v1511
  %v1513 = vrot.slane %v1508, %v1512
  %v1515 = vadd.f32 %v1507, %v1513
  %vm1516 = vcmask 1024
  %1517 = vst.msk [vmem:[%s12] sm:$0x3] %vm1516, %v1515
  // Predicated region
  $region50: #{discriminator_forward.1} parent=0 // pred_check
    _
  $region51: #{discriminator_forward.1} parent=0 // pred_check_branch
    %1519 = sbr.rel (0) target = $region53
  $region52: #{discriminator_forward.1} parent=0 // pred_region
    _
  $region53: #{discriminator_forward.1} parent=0 // pred_fallthru
    _
  // Predicated region
  $region54: #{discriminator_forward.1} parent=0 // pred_check
    _
  $region55: #{discriminator_forward.1} parent=0 // pred_check_branch
    %1521 = sbr.rel (0) target = $region57
  $region56: #{discriminator_forward.1} parent=0 // pred_region
    _
  $region57: #{discriminator_forward.1} parent=0 // pred_fallthru
    _

</llo_original>
